<compile_context>
chip_gen: v7x
topology: tpu7x:2x2x1
jax: 0.10.0
libtpu: 0.0.40
codegen_flags: <defaults>
</compile_context>

<pallas_src>
import jax
import jax.numpy as jnp
from jax.experimental import pallas as pl
from jax.experimental.pallas import tpu as pltpu

K = 31   # avg_pool2d kernel size
P = 15   # avg_pool2d padding (= (K-1)//2)


def _log1p_exp_neg_abs(x):
    """log1p(exp(-|x|)) to f32 accuracy using ops with guaranteed Mosaic lowering.

    For z = exp(-|x|) <= 1e-4 the two-term series z*(1 - z/2) equals log1p(z)
    to float32 precision (avoids the 1+z rounding loss); otherwise log(1+z) is
    accurate to ~1e-7 absolute.
    """
    z = jnp.exp(-jnp.abs(x))
    return jnp.where(z > 1e-4, jnp.log(1.0 + z), z * (1.0 - 0.5 * z))


def _bwbce_kernel(x_ref, t_ref, out_ref):
    x = x_ref[...].astype(jnp.float32)     # (BC, H, W) logits
    t = t_ref[...].astype(jnp.float32)     # (BC, H, W) targets
    bc, h, w = x.shape

    # 0/1 band matrices — exact encoding of the zero-padded
    # (count_include_pad=True) 31x31 box filter:
    #   avg_pool2d(t, 31, stride=1, pad=15) == (B_H @ t @ B_W) / 961
    ih = jax.lax.broadcasted_iota(jnp.int32, (h, h), 0)
    jh = jax.lax.broadcasted_iota(jnp.int32, (h, h), 1)
    band_h = (jnp.abs(ih - jh) <= P).astype(jnp.float32)        # (H, H)
    iw = jax.lax.broadcasted_iota(jnp.int32, (w, w), 0)
    jw = jax.lax.broadcasted_iota(jnp.int32, (w, w), 1)
    band_w = (jnp.abs(iw - jw) <= P).astype(jnp.float32)        # (W, W)

    band_h_b = jnp.broadcast_to(band_h, (bc, h, h))
    band_w_b = jnp.broadcast_to(band_w, (bc, w, w))

    # Separable box filter as two batched MXU matmuls (exact: 0/1 multiplicands).
    rows = jnp.einsum('bij,bjw->biw', band_h_b, t,
                      preferred_element_type=jnp.float32)
    box = jnp.einsum('biw,bwk->bik', rows, band_w_b,
                     preferred_element_type=jnp.float32)
    avg = box * (1.0 / float(K * K))

    weight = 1.0 + 5.0 * jnp.abs(avg - t)

    # Numerically stable BCE with logits (reduction='none').
    bce = jnp.maximum(x, 0.0) - x * t + _log1p_exp_neg_abs(x)

    # Per-step partial sum, broadcast over the full (1, 8, 128) output tile so
    # the store is an unmasked full-tile vst.  The wrapper reads [:, 0, 0].
    s = jnp.sum(weight * bce)
    out_ref[...] = jnp.zeros_like(out_ref) + s


def _planes_per_step(num_planes, cap=8):
    """Largest divisor of num_planes that is <= cap (planes batched per step)."""
    for bc in range(min(num_planes, cap), 0, -1):
        if num_planes % bc == 0:
            return bc
    return 1


def boundary_weighted_bce_loss_sum(inputs, targets, *, max_planes_per_step=8):
    """Equivalent of torch.sum(BoundaryWeightedBCELoss(reduction='none')(inputs, targets))."""
    assert inputs.shape == targets.shape, (inputs.shape, targets.shape)
    n, c, h, w = inputs.shape
    nc = n * c
    bc = _planes_per_step(nc, max_planes_per_step)
    g = nc // bc

    x = inputs.reshape(nc, h, w)
    t = targets.reshape(nc, h, w)

    partials = pl.pallas_call(
        _bwbce_kernel,
        out_shape=jax.ShapeDtypeStruct((g, 8, 128), jnp.float32),
        grid_spec=pltpu.PrefetchScalarGridSpec(
            num_scalar_prefetch=0,
            grid=(g,),
            in_specs=[
                pl.BlockSpec((bc, h, w), lambda i: (i, 0, 0)),
                pl.BlockSpec((bc, h, w), lambda i: (i, 0, 0)),
            ],
            out_specs=pl.BlockSpec((1, 8, 128), lambda i: (i, 0, 0)),
        ),
        compiler_params=pltpu.CompilerParams(
            dimension_semantics=("parallel",)),
    )(x, t)

    # Tiny final reduction over per-step partial sums (one element per step).
    return jnp.sum(partials[:, 0, 0])


def _reference(inputs, targets):
    """Pure-JAX reference mirroring the PyTorch forward pass."""
    N, C, H, W = targets.shape
    tp = jnp.pad(targets, ((0, 0), (0, 0), (P, P), (P, P)))
    rows = jnp.zeros((N, C, H, W + 2 * P), jnp.float32)
    for dr in range(K):
        rows = rows + tp[:, :, dr:dr + H, :]
    box = jnp.zeros((N, C, H, W), jnp.float32)
    for dc in range(K):
        box = box + rows[:, :, :, dc:dc + W]
    avg = box / (K * K)
    weight = 1.0 + 5.0 * jnp.abs(avg - targets)
    x, t = inputs, targets
    bce = jnp.maximum(x, 0.0) - x * t + jnp.log1p(jnp.exp(-jnp.abs(x)))
    return jnp.sum(weight * bce)


if __name__ == "__main__":
    key = jax.random.PRNGKey(0)
    k1, k2 = jax.random.split(key)
    N, C, H, W = 2, 4, 16, 16
    inputs = jax.random.normal(k1, (N, C, H, W), dtype=jnp.float32)      # logits
    targets = jax.random.uniform(k2, (N, C, H, W), dtype=jnp.float32)    # soft targets in [0,1]

    out = boundary_weighted_bce_loss_sum(inputs, targets)
    out = jax.block_until_ready(out)

    ref = _reference(inputs, targets)
    assert jnp.allclose(out, ref, rtol=1e-4, atol=1e-4), (float(out), float(ref))
    print("KERNEL_OK")
</pallas_src>

<mosaic_0001>
module attributes {stable_mosaic.version = 11 : i64} {
  func.func @_bwbce_kernel(%arg0: i32, %arg1: memref<8x16x16xf32, #tpu.memory_space<vmem>>, %arg2: memref<8x16x16xf32, #tpu.memory_space<vmem>>, %arg3: memref<1x8x128xf32, #tpu.memory_space<vmem>>) attributes {dimension_semantics = [#tpu.dimension_semantics<parallel>], iteration_bounds = array<i64: 1>, scalar_prefetch = 0 : i64, scratch_operands = 0 : i64, tpu.core_type = #tpu.core_type<tc>, window_params = [{transform_indices = @transform_0, window_bounds = array<i64: 8, 16, 16>}, {transform_indices = @transform_1, window_bounds = array<i64: 8, 16, 16>}, {transform_indices = @transform_2, window_bounds = array<i64: 1, 8, 128>}]} {
    %c0 = arith.constant 0 : index
    %c0_0 = arith.constant 0 : index
    %c0_1 = arith.constant 0 : index
    %0 = vector.load %arg1[%c0, %c0_0, %c0_1] : memref<8x16x16xf32, #tpu.memory_space<vmem>>, vector<8x16x16xf32>
    %c0_2 = arith.constant 0 : index
    %c0_3 = arith.constant 0 : index
    %c0_4 = arith.constant 0 : index
    %1 = vector.load %arg2[%c0_2, %c0_3, %c0_4] : memref<8x16x16xf32, #tpu.memory_space<vmem>>, vector<8x16x16xf32>
    %2 = tpu.iota {dimensions = array<i32: 0>} : vector<16x16xi32>
    %3 = tpu.iota {dimensions = array<i32: 1>} : vector<16x16xi32>
    %4 = arith.subi %2, %3 : vector<16x16xi32>
    %5 = math.absi %4 : vector<16x16xi32>
    %c15_i32 = arith.constant 15 : i32
    %6 = vector.broadcast %c15_i32 : i32 to vector<16x16xi32>
    %7 = arith.cmpi sle, %5, %6 : vector<16x16xi32>
    %8 = arith.extui %7 : vector<16x16xi1> to vector<16x16xi32>
    %9 = arith.sitofp %8 : vector<16x16xi32> to vector<16x16xf32>
    %10 = tpu.iota {dimensions = array<i32: 0>} : vector<16x16xi32>
    %11 = tpu.iota {dimensions = array<i32: 1>} : vector<16x16xi32>
    %12 = arith.subi %10, %11 : vector<16x16xi32>
    %13 = math.absi %12 : vector<16x16xi32>
    %c15_i32_5 = arith.constant 15 : i32
    %14 = vector.broadcast %c15_i32_5 : i32 to vector<16x16xi32>
    %15 = arith.cmpi sle, %13, %14 : vector<16x16xi32>
    %16 = arith.extui %15 : vector<16x16xi1> to vector<16x16xi32>
    %17 = arith.sitofp %16 : vector<16x16xi32> to vector<16x16xf32>
    %18 = vector.shape_cast %9 : vector<16x16xf32> to vector<1x16x16xf32>
    %19 = vector.broadcast %18 : vector<1x16x16xf32> to vector<8x16x16xf32>
    %20 = vector.shape_cast %17 : vector<16x16xf32> to vector<1x16x16xf32>
    %21 = vector.broadcast %20 : vector<1x16x16xf32> to vector<8x16x16xf32>
    "tpu.trace_start"() <{level = 10 : i32, message = "bij,bjw->biw"}> : () -> ()
    %cst = arith.constant dense<0.000000e+00> : vector<8x16x16xf32>
    %22 = tpu.matmul %19, %1, %cst {dimension_numbers = #tpu.dot_dimension_numbers<[2], [1], [1], [2], [0, 0, 0, 1, 1, 2], [0], [0]>} : vector<8x16x16xf32>, vector<8x16x16xf32>, vector<8x16x16xf32> -> vector<8x16x16xf32>
    "tpu.trace_stop"() : () -> ()
    "tpu.trace_start"() <{level = 10 : i32, message = "biw,bwk->bik"}> : () -> ()
    %cst_6 = arith.constant dense<0.000000e+00> : vector<8x16x16xf32>
    %23 = tpu.matmul %22, %21, %cst_6 {dimension_numbers = #tpu.dot_dimension_numbers<[2], [1], [1], [2], [0, 0, 0, 1, 1, 2], [0], [0]>} : vector<8x16x16xf32>, vector<8x16x16xf32>, vector<8x16x16xf32> -> vector<8x16x16xf32>
    "tpu.trace_stop"() : () -> ()
    %cst_7 = arith.constant 0.00104058278 : f32
    %24 = vector.broadcast %cst_7 : f32 to vector<8x16x16xf32>
    %25 = arith.mulf %23, %24 : vector<8x16x16xf32>
    %26 = arith.subf %25, %1 : vector<8x16x16xf32>
    %27 = math.absf %26 : vector<8x16x16xf32>
    %cst_8 = arith.constant 5.000000e+00 : f32
    %28 = vector.broadcast %cst_8 : f32 to vector<8x16x16xf32>
    %29 = arith.mulf %28, %27 : vector<8x16x16xf32>
    %cst_9 = arith.constant 1.000000e+00 : f32
    %30 = vector.broadcast %cst_9 : f32 to vector<8x16x16xf32>
    %31 = arith.addf %30, %29 : vector<8x16x16xf32>
    %cst_10 = arith.constant 0.000000e+00 : f32
    %32 = vector.broadcast %cst_10 : f32 to vector<8x16x16xf32>
    %33 = arith.maximumf %0, %32 : vector<8x16x16xf32>
    %34 = arith.mulf %0, %1 : vector<8x16x16xf32>
    %35 = arith.subf %33, %34 : vector<8x16x16xf32>
    %36 = math.absf %0 : vector<8x16x16xf32>
    %cst_11 = arith.constant 0.000000e+00 : f32
    %37 = vector.broadcast %cst_11 : f32 to vector<8x16x16xf32>
    %38 = arith.subf %37, %36 : vector<8x16x16xf32>
    %39 = math.exp %38 : vector<8x16x16xf32>
    %cst_12 = arith.constant 9.99999974E-5 : f32
    %40 = vector.broadcast %cst_12 : f32 to vector<8x16x16xf32>
    %41 = arith.cmpf ogt, %39, %40 : vector<8x16x16xf32>
    %cst_13 = arith.constant 1.000000e+00 : f32
    %42 = vector.broadcast %cst_13 : f32 to vector<8x16x16xf32>
    %43 = arith.addf %42, %39 : vector<8x16x16xf32>
    %44 = math.log %43 : vector<8x16x16xf32>
    %cst_14 = arith.constant 5.000000e-01 : f32
    %45 = vector.broadcast %cst_14 : f32 to vector<8x16x16xf32>
    %46 = arith.mulf %45, %39 : vector<8x16x16xf32>
    %cst_15 = arith.constant 1.000000e+00 : f32
    %47 = vector.broadcast %cst_15 : f32 to vector<8x16x16xf32>
    %48 = arith.subf %47, %46 : vector<8x16x16xf32>
    %49 = arith.mulf %39, %48 : vector<8x16x16xf32>
    %50 = arith.select %41, %44, %49 : vector<8x16x16xi1>, vector<8x16x16xf32>
    %51 = arith.addf %35, %50 : vector<8x16x16xf32>
    %52 = arith.mulf %31, %51 : vector<8x16x16xf32>
    %53 = vector.shape_cast %52 : vector<8x16x16xf32> to vector<1x8x16x16xf32>
    %cst_16 = arith.constant dense<0.000000e+00> : vector<1xf32>
    %54 = vector.multi_reduction <add>, %53, %cst_16 [1, 2, 3] : vector<1x8x16x16xf32> to vector<1xf32>
    %55 = vector.shape_cast %54 : vector<1xf32> to vector<1x1x1x1xf32>
    %56 = vector.extract %55[0, 0, 0, 0] : f32 from vector<1x1x1x1xf32>
    %cst_17 = arith.constant 0.000000e+00 : f32
    %57 = vector.broadcast %cst_17 : f32 to vector<1x8x128xf32>
    %58 = vector.broadcast %56 : f32 to vector<1x8x128xf32>
    %59 = arith.addf %57, %58 : vector<1x8x128xf32>
    %c0_18 = arith.constant 0 : index
    %c0_19 = arith.constant 0 : index
    %c0_20 = arith.constant 0 : index
    %60 = vector.load %arg3[%c0_18, %c0_19, %c0_20] : memref<1x8x128xf32, #tpu.memory_space<vmem>>, vector<1x8x128xf32>
    tpu.vector_store %arg3[%c0_18, %c0_19, %c0_20], %59 {strides = array<i32>} : memref<1x8x128xf32, #tpu.memory_space<vmem>>, vector<1x8x128xf32>,
    return
  }
  func.func @transform_0(%arg0: i32) -> (i32, i32, i32) {
    %c0_i32 = arith.constant 0 : i32
    %c0_i32_0 = arith.constant 0 : i32
    %c0_i32_1 = arith.constant 0 : i32
    return %arg0, %c0_i32, %c0_i32_0 : i32, i32, i32
  }
  func.func @transform_1(%arg0: i32) -> (i32, i32, i32) {
    %c0_i32 = arith.constant 0 : i32
    %c0_i32_0 = arith.constant 0 : i32
    %c0_i32_1 = arith.constant 0 : i32
    return %arg0, %c0_i32, %c0_i32_0 : i32, i32, i32
  }
  func.func @transform_2(%arg0: i32) -> (i32, i32, i32) {
    %c0_i32 = arith.constant 0 : i32
    %c0_i32_0 = arith.constant 0 : i32
    %c0_i32_1 = arith.constant 0 : i32
    return %arg0, %c0_i32, %c0_i32_0 : i32, i32, i32
  }
}

</mosaic_0001>

<llo_original>
// kernel: tpu_custom_call.1
$region0: #{tpu_custom_call.1}
  #allocation0 [shape = 'u32[]', space=smem, size = 0x4, offset = 0x4, fixed_abs, tag = 'smem constant byte address 0x4 - core index']
  #allocation1 [shape = 'u32[144,128]{1,0:T(1,128)}', space=vmem, size = 0x12000, scoped, tag = 'internal scratch']
  %s0 = inlined_call_operand.hbm [shape: f32[8,16,16], index: 0, kind: input, shape index: {}]
  %s1 = inlined_call_operand.hbm [shape: f32[8,16,16], index: 1, kind: input, shape index: {}]
  %s2 = inlined_call_operand.hbm [shape: f32[1,8,128], index: 2, kind: output, shape index: {}]
  %s3 = sld [smem:[#allocation0]]
  $region26: #{tpu_custom_call.1} parent=0
    _
  %s5 = ssub.s32 1, %s3
  %s6 = scalar_select 0, %s5, %s3
  $region1: #{tpu_custom_call.1} parent=0
    #allocation2 [shape = 'u8[65536]{0}', space=vmem, size = 0x10000, scoped, tag = 'input window, operand 0, single buffered']
    #allocation3 [shape = 's32[1]{0}', space=sflag, size = 0x4, scoped, tag = 'scoped memory for tpu_custom_call.1']
    #allocation4 [shape = 's32[1]{0}', space=sflag, size = 0x4, scoped, tag = 'scoped memory for tpu_custom_call.1']
    #allocation5 [shape = 'u8[65536]{0}', space=vmem, size = 0x10000, scoped, tag = 'input window, operand 1, single buffered']
    #allocation6 [shape = 's32[1]{0}', space=sflag, size = 0x4, scoped, tag = 'scoped memory for tpu_custom_call.1']
    #allocation7 [shape = 'u8[4096]{0}', space=vmem, size = 0x1000, scoped, tag = 'output window, operand 0, single buffered']
    %7 = vsyncpa [#allocation3], 0
    %8 = vsyncpa [#allocation6], 0
    %9 = vsyncpa [#allocation4], 0
    // Predicated region
    $region2: #{tpu_custom_call.1} parent=1 // pred_check
      _
    $region3: #{tpu_custom_call.1} parent=1 // pred_check_branch
      %11 = sbr.rel (0) target = $region5
    $region4: #{tpu_custom_call.1} parent=1 // pred_region
      %s13 = ssub.s32 2048, 2048
      %14 = vsyncadd [#allocation3], %s13
      %s15 = sshll.u32 [#allocation2], 4
      %s16 = int_to_ptr.vmem [resolvable:$true] %s15
      %21 = dma.hbm_to_vmem [thread:$0]  %s0, 2048, %s16, [#allocation3], 128, 128, 8
    $region5: #{tpu_custom_call.1} parent=1 // pred_fallthru
      _
    // Predicated region
    $region6: #{tpu_custom_call.1} parent=1 // pred_check
      _
    $region7: #{tpu_custom_call.1} parent=1 // pred_check_branch
      %23 = sbr.rel (0) target = $region9
    $region8: #{tpu_custom_call.1} parent=1 // pred_region
      %s25 = ssub.s32 2048, 2048
      %26 = vsyncadd [#allocation6], %s25
      %s27 = sshll.u32 [#allocation5], 4
      %s28 = int_to_ptr.vmem [resolvable:$true] %s27
      %33 = dma.hbm_to_vmem [thread:$0]  %s1, 2048, %s28, [#allocation6], 128, 128, 8
    $region9: #{tpu_custom_call.1} parent=1 // pred_fallthru
      _
    // Predicated region
    $region10: #{tpu_custom_call.1} parent=1 // pred_check
      _
    $region11: #{tpu_custom_call.1} parent=1 // pred_check_branch
      %35 = sbr.rel (0) target = $region13
    $region12: #{tpu_custom_call.1} parent=1 // pred_region
      %36 = dma.done [#allocation3], 2048
    $region13: #{tpu_custom_call.1} parent=1 // pred_fallthru
      _
    // Predicated region
    $region14: #{tpu_custom_call.1} parent=1 // pred_check
      _
    $region15: #{tpu_custom_call.1} parent=1 // pred_check_branch
      %38 = sbr.rel (0) target = $region17
    $region16: #{tpu_custom_call.1} parent=1 // pred_region
      %39 = dma.done [#allocation6], 2048
    $region17: #{tpu_custom_call.1} parent=1 // pred_fallthru
      _
    %v40 = vld [vmem:[#allocation2] sm:$0xff]
    %v41 = vld [vmem:[#allocation2 + $0x8] sm:$0xff]
    %v42 = vld [vmem:[#allocation2 + $0x10] sm:$0xff]
    %v43 = vld [vmem:[#allocation2 + $0x18] sm:$0xff]
    %v44 = vld [vmem:[#allocation2 + $0x20] sm:$0xff]
    %v45 = vld [vmem:[#allocation2 + $0x28] sm:$0xff]
    %v46 = vld [vmem:[#allocation2 + $0x30] sm:$0xff]
    %v47 = vld [vmem:[#allocation2 + $0x38] sm:$0xff]
    %v48 = vld [vmem:[#allocation2 + $0x40] sm:$0xff]
    %v49 = vld [vmem:[#allocation2 + $0x48] sm:$0xff]
    %v50 = vld [vmem:[#allocation2 + $0x50] sm:$0xff]
    %v51 = vld [vmem:[#allocation2 + $0x58] sm:$0xff]
    %v52 = vld [vmem:[#allocation2 + $0x60] sm:$0xff]
    %v53 = vld [vmem:[#allocation2 + $0x68] sm:$0xff]
    %v54 = vld [vmem:[#allocation2 + $0x70] sm:$0xff]
    %v55 = vld [vmem:[#allocation2 + $0x78] sm:$0xff]
    %v56 = vld [vmem:[#allocation5] sm:$0xff]
    %v57 = vld [vmem:[#allocation5 + $0x8] sm:$0xff]
    %v58 = vld [vmem:[#allocation5 + $0x10] sm:$0xff]
    %v59 = vld [vmem:[#allocation5 + $0x18] sm:$0xff]
    %v60 = vld [vmem:[#allocation5 + $0x20] sm:$0xff]
    %v61 = vld [vmem:[#allocation5 + $0x28] sm:$0xff]
    %v62 = vld [vmem:[#allocation5 + $0x30] sm:$0xff]
    %v63 = vld [vmem:[#allocation5 + $0x38] sm:$0xff]
    %v64 = vld [vmem:[#allocation5 + $0x40] sm:$0xff]
    %v65 = vld [vmem:[#allocation5 + $0x48] sm:$0xff]
    %v66 = vld [vmem:[#allocation5 + $0x50] sm:$0xff]
    %v67 = vld [vmem:[#allocation5 + $0x58] sm:$0xff]
    %v68 = vld [vmem:[#allocation5 + $0x60] sm:$0xff]
    %v69 = vld [vmem:[#allocation5 + $0x68] sm:$0xff]
    %v70 = vld [vmem:[#allocation5 + $0x70] sm:$0xff]
    %v71 = vld [vmem:[#allocation5 + $0x78] sm:$0xff]
    %v72 = vlaneseq
    %v73 = vshrl.u32 %v72, 7
    %v74 = vadd.s32 %v73, 8
    %v75 = vlaneseq
    %v76 = vand.u32 %v75, 127
    %v77 = vsub.s32 %v73, %v76
    %v78 = vsub.s32 %v74, %v76
    %vm79 = vcmp.lt.s32.totalorder %v77, 0
    %v80 = vsub.s32 0, %v77
    %v81 = vsel %vm79, %v80, %v77
    %vm82 = vcmp.lt.s32.totalorder %v78, 0
    %v83 = vsub.s32 0, %v78
    %v84 = vsel %vm82, %v83, %v78
    %vm85 = vcmp.le.s32.totalorder %v81, 15
    %vm86 = vcmp.le.s32.totalorder %v84, 15
    %v87 = vsel %vm85, 1, 0
    %v88 = vsel %vm86, 1, 0
    %v89 = vcvt.s32.f32 %v87
    %v90 = vcvt.s32.f32 %v88
    %vm91 = vcmask 130048
    %v93 = vsel %vm91, %v89, 0
    %v96 = vsel %vm91, %v90, 0
    %98 = vmatprep.subr.mxu0 0.0
    %99 = vmatpush1.msra.mxu0 %v56
    %100 = vmatprep.subr.mxu0 0.0
    %101 = vmatpush1.msra.mxu0 %v57
    %102 = vmatprep.subr.mxu0 0.0
    %103 = vmatpush1.msra.mxu0 0.0
    %104 = vmatprep.subr.mxu0 0.0
    %105 = vmatpush1.msra.mxu0 0.0
    %106 = vmatprep.subr.mxu0 0.0
    %107 = vmatpush1.msra.mxu0 0.0
    %108 = vmatprep.subr.mxu0 0.0
    %109 = vmatpush1.msra.mxu0 0.0
    %110 = vmatprep.subr.mxu0 0.0
    %111 = vmatpush1.msra.mxu0 0.0
    %112 = vmatprep.subr.mxu0 0.0
    %113 = vmatpush1.msra.mxu0 0.0
    %114 = vmatprep.subr.mxu0 0.0
    %115 = vmatpush1.msra.mxu0 0.0
    %116 = vmatprep.subr.mxu0 0.0
    %117 = vmatpush1.msra.mxu0 0.0
    %118 = vmatprep.subr.mxu0 0.0
    %119 = vmatpush1.msra.mxu0 0.0
    %120 = vmatprep.subr.mxu0 0.0
    %121 = vmatpush1.msra.mxu0 0.0
    %122 = vmatprep.subr.mxu0 0.0
    %123 = vmatpush1.msra.mxu0 0.0
    %124 = vmatprep.subr.mxu0 0.0
    %125 = vmatpush1.msra.mxu0 0.0
    %126 = vmatprep.subr.mxu0 0.0
    %127 = vmatpush1.msra.mxu0 0.0
    %128 = vmatprep.subr.mxu0 0.0
    %129 = vmatpush1.msra.mxu0 0.0
    %130 = vmatprep.subr.mxu0 0.0
    %131 = vmatpush1.msra.mxu0 0.0
    %132 = vmatprep.subr.mxu0 0.0
    %133 = vmatpush1.msra.mxu0 0.0
    %134 = vmatprep.subr.mxu0 0.0
    %135 = vmatpush1.msra.mxu0 0.0
    %136 = vmatprep.subr.mxu0 0.0
    %137 = vmatpush1.msra.mxu0 0.0
    %138 = vmatprep.subr.mxu0 0.0
    %139 = vmatpush1.msra.mxu0 0.0
    %140 = vmatprep.subr.mxu0 0.0
    %141 = vmatpush1.msra.mxu0 0.0
    %142 = vmatprep.subr.mxu0 0.0
    %143 = vmatpush1.msra.mxu0 0.0
    %144 = vmatprep.subr.mxu0 0.0
    %145 = vmatpush1.msra.mxu0 0.0
    %146 = vmatprep.subr.mxu0 0.0
    %147 = vmatpush1.msra.mxu0 0.0
    %148 = vmatprep.subr.mxu0 0.0
    %149 = vmatpush1.msra.mxu0 0.0
    %150 = vmatprep.subr.mxu0 0.0
    %151 = vmatpush1.msra.mxu0 0.0
    %152 = vmatprep.subr.mxu0 0.0
    %153 = vmatpush1.msra.mxu0 0.0
    %154 = vmatprep.subr.mxu0 0.0
    %155 = vmatpush1.msra.mxu0 0.0
    %156 = vmatprep.subr.mxu0 0.0
    %157 = vmatpush1.msra.mxu0 0.0
    %158 = vmatprep.subr.mxu0 0.0
    %159 = vmatpush1.msra.mxu0 0.0
    %160 = vmatprep.subr.mxu0 0.0
    %161 = vmatpush1.msra.mxu0 0.0
    %162 = vmatprep.mubr.f32.mxu0 0.0
    %163 = vmatmul.mubr.f32.gmra.mrb[0].mxu0 %v93
    %v164 = vpop.f32.mrb[0].mxu0
    %v165 = vadd.f32 0.0, %v164
    %v166 = vpop.f32.mrb[0].mxu0
    %167 = vmatprep.mubr.f32.mxu0 0.0
    %168 = vmatmul.mubr.f32.gmra.mrb[0].mxu0 %v96
    %v169 = vpop.f32.mrb[0].mxu0
    %v170 = vadd.f32 0.0, %v169
    %v171 = vpop.f32.mrb[0].mxu0
    %172 = vdwg.mxu0
    %173 = vmatprep.subr.mxu0 0.0
    %174 = vmatpush1.msra.mxu0 %v58
    %175 = vmatprep.subr.mxu0 0.0
    %176 = vmatpush1.msra.mxu0 %v59
    %177 = vmatprep.subr.mxu0 0.0
    %178 = vmatpush1.msra.mxu0 0.0
    %179 = vmatprep.subr.mxu0 0.0
    %180 = vmatpush1.msra.mxu0 0.0
    %181 = vmatprep.subr.mxu0 0.0
    %182 = vmatpush1.msra.mxu0 0.0
    %183 = vmatprep.subr.mxu0 0.0
    %184 = vmatpush1.msra.mxu0 0.0
    %185 = vmatprep.subr.mxu0 0.0
    %186 = vmatpush1.msra.mxu0 0.0
    %187 = vmatprep.subr.mxu0 0.0
    %188 = vmatpush1.msra.mxu0 0.0
    %189 = vmatprep.subr.mxu0 0.0
    %190 = vmatpush1.msra.mxu0 0.0
    %191 = vmatprep.subr.mxu0 0.0
    %192 = vmatpush1.msra.mxu0 0.0
    %193 = vmatprep.subr.mxu0 0.0
    %194 = vmatpush1.msra.mxu0 0.0
    %195 = vmatprep.subr.mxu0 0.0
    %196 = vmatpush1.msra.mxu0 0.0
    %197 = vmatprep.subr.mxu0 0.0
    %198 = vmatpush1.msra.mxu0 0.0
    %199 = vmatprep.subr.mxu0 0.0
    %200 = vmatpush1.msra.mxu0 0.0
    %201 = vmatprep.subr.mxu0 0.0
    %202 = vmatpush1.msra.mxu0 0.0
    %203 = vmatprep.subr.mxu0 0.0
    %204 = vmatpush1.msra.mxu0 0.0
    %205 = vmatprep.subr.mxu0 0.0
    %206 = vmatpush1.msra.mxu0 0.0
    %207 = vmatprep.subr.mxu0 0.0
    %208 = vmatpush1.msra.mxu0 0.0
    %209 = vmatprep.subr.mxu0 0.0
    %210 = vmatpush1.msra.mxu0 0.0
    %211 = vmatprep.subr.mxu0 0.0
    %212 = vmatpush1.msra.mxu0 0.0
    %213 = vmatprep.subr.mxu0 0.0
    %214 = vmatpush1.msra.mxu0 0.0
    %215 = vmatprep.subr.mxu0 0.0
    %216 = vmatpush1.msra.mxu0 0.0
    %217 = vmatprep.subr.mxu0 0.0
    %218 = vmatpush1.msra.mxu0 0.0
    %219 = vmatprep.subr.mxu0 0.0
    %220 = vmatpush1.msra.mxu0 0.0
    %221 = vmatprep.subr.mxu0 0.0
    %222 = vmatpush1.msra.mxu0 0.0
    %223 = vmatprep.subr.mxu0 0.0
    %224 = vmatpush1.msra.mxu0 0.0
    %225 = vmatprep.subr.mxu0 0.0
    %226 = vmatpush1.msra.mxu0 0.0
    %227 = vmatprep.subr.mxu0 0.0
    %228 = vmatpush1.msra.mxu0 0.0
    %229 = vmatprep.subr.mxu0 0.0
    %230 = vmatpush1.msra.mxu0 0.0
    %231 = vmatprep.subr.mxu0 0.0
    %232 = vmatpush1.msra.mxu0 0.0
    %233 = vmatprep.subr.mxu0 0.0
    %234 = vmatpush1.msra.mxu0 0.0
    %235 = vmatprep.subr.mxu0 0.0
    %236 = vmatpush1.msra.mxu0 0.0
    %237 = vmatprep.mubr.f32.mxu0 0.0
    %238 = vmatmul.mubr.f32.gmra.mrb[0].mxu0 %v93
    %v239 = vpop.f32.mrb[0].mxu0
    %v240 = vadd.f32 0.0, %v239
    %v241 = vpop.f32.mrb[0].mxu0
    %242 = vmatprep.mubr.f32.mxu0 0.0
    %243 = vmatmul.mubr.f32.gmra.mrb[0].mxu0 %v96
    %v244 = vpop.f32.mrb[0].mxu0
    %v245 = vadd.f32 0.0, %v244
    %v246 = vpop.f32.mrb[0].mxu0
    %247 = vdwg.mxu0
    %248 = vmatprep.subr.mxu0 0.0
    %249 = vmatpush1.msra.mxu0 %v60
    %250 = vmatprep.subr.mxu0 0.0
    %251 = vmatpush1.msra.mxu0 %v61
    %252 = vmatprep.subr.mxu0 0.0
    %253 = vmatpush1.msra.mxu0 0.0
    %254 = vmatprep.subr.mxu0 0.0
    %255 = vmatpush1.msra.mxu0 0.0
    %256 = vmatprep.subr.mxu0 0.0
    %257 = vmatpush1.msra.mxu0 0.0
    %258 = vmatprep.subr.mxu0 0.0
    %259 = vmatpush1.msra.mxu0 0.0
    %260 = vmatprep.subr.mxu0 0.0
    %261 = vmatpush1.msra.mxu0 0.0
    %262 = vmatprep.subr.mxu0 0.0
    %263 = vmatpush1.msra.mxu0 0.0
    %264 = vmatprep.subr.mxu0 0.0
    %265 = vmatpush1.msra.mxu0 0.0
    %266 = vmatprep.subr.mxu0 0.0
    %267 = vmatpush1.msra.mxu0 0.0
    %268 = vmatprep.subr.mxu0 0.0
    %269 = vmatpush1.msra.mxu0 0.0
    %270 = vmatprep.subr.mxu0 0.0
    %271 = vmatpush1.msra.mxu0 0.0
    %272 = vmatprep.subr.mxu0 0.0
    %273 = vmatpush1.msra.mxu0 0.0
    %274 = vmatprep.subr.mxu0 0.0
    %275 = vmatpush1.msra.mxu0 0.0
    %276 = vmatprep.subr.mxu0 0.0
    %277 = vmatpush1.msra.mxu0 0.0
    %278 = vmatprep.subr.mxu0 0.0
    %279 = vmatpush1.msra.mxu0 0.0
    %280 = vmatprep.subr.mxu0 0.0
    %281 = vmatpush1.msra.mxu0 0.0
    %282 = vmatprep.subr.mxu0 0.0
    %283 = vmatpush1.msra.mxu0 0.0
    %284 = vmatprep.subr.mxu0 0.0
    %285 = vmatpush1.msra.mxu0 0.0
    %286 = vmatprep.subr.mxu0 0.0
    %287 = vmatpush1.msra.mxu0 0.0
    %288 = vmatprep.subr.mxu0 0.0
    %289 = vmatpush1.msra.mxu0 0.0
    %290 = vmatprep.subr.mxu0 0.0
    %291 = vmatpush1.msra.mxu0 0.0
    %292 = vmatprep.subr.mxu0 0.0
    %293 = vmatpush1.msra.mxu0 0.0
    %294 = vmatprep.subr.mxu0 0.0
    %295 = vmatpush1.msra.mxu0 0.0
    %296 = vmatprep.subr.mxu0 0.0
    %297 = vmatpush1.msra.mxu0 0.0
    %298 = vmatprep.subr.mxu0 0.0
    %299 = vmatpush1.msra.mxu0 0.0
    %300 = vmatprep.subr.mxu0 0.0
    %301 = vmatpush1.msra.mxu0 0.0
    %302 = vmatprep.subr.mxu0 0.0
    %303 = vmatpush1.msra.mxu0 0.0
    %304 = vmatprep.subr.mxu0 0.0
    %305 = vmatpush1.msra.mxu0 0.0
    %306 = vmatprep.subr.mxu0 0.0
    %307 = vmatpush1.msra.mxu0 0.0
    %308 = vmatprep.subr.mxu0 0.0
    %309 = vmatpush1.msra.mxu0 0.0
    %310 = vmatprep.subr.mxu0 0.0
    %311 = vmatpush1.msra.mxu0 0.0
    %312 = vmatprep.mubr.f32.mxu0 0.0
    %313 = vmatmul.mubr.f32.gmra.mrb[0].mxu0 %v93
    %v314 = vpop.f32.mrb[0].mxu0
    %v315 = vadd.f32 0.0, %v314
    %v316 = vpop.f32.mrb[0].mxu0
    %317 = vmatprep.mubr.f32.mxu0 0.0
    %318 = vmatmul.mubr.f32.gmra.mrb[0].mxu0 %v96
    %v319 = vpop.f32.mrb[0].mxu0
    %v320 = vadd.f32 0.0, %v319
    %v321 = vpop.f32.mrb[0].mxu0
    %322 = vdwg.mxu0
    %323 = vmatprep.subr.mxu0 0.0
    %324 = vmatpush1.msra.mxu0 %v62
    %325 = vmatprep.subr.mxu0 0.0
    %326 = vmatpush1.msra.mxu0 %v63
    %327 = vmatprep.subr.mxu0 0.0
    %328 = vmatpush1.msra.mxu0 0.0
    %329 = vmatprep.subr.mxu0 0.0
    %330 = vmatpush1.msra.mxu0 0.0
    %331 = vmatprep.subr.mxu0 0.0
    %332 = vmatpush1.msra.mxu0 0.0
    %333 = vmatprep.subr.mxu0 0.0
    %334 = vmatpush1.msra.mxu0 0.0
    %335 = vmatprep.subr.mxu0 0.0
    %336 = vmatpush1.msra.mxu0 0.0
    %337 = vmatprep.subr.mxu0 0.0
    %338 = vmatpush1.msra.mxu0 0.0
    %339 = vmatprep.subr.mxu0 0.0
    %340 = vmatpush1.msra.mxu0 0.0
    %341 = vmatprep.subr.mxu0 0.0
    %342 = vmatpush1.msra.mxu0 0.0
    %343 = vmatprep.subr.mxu0 0.0
    %344 = vmatpush1.msra.mxu0 0.0
    %345 = vmatprep.subr.mxu0 0.0
    %346 = vmatpush1.msra.mxu0 0.0
    %347 = vmatprep.subr.mxu0 0.0
    %348 = vmatpush1.msra.mxu0 0.0
    %349 = vmatprep.subr.mxu0 0.0
    %350 = vmatpush1.msra.mxu0 0.0
    %351 = vmatprep.subr.mxu0 0.0
    %352 = vmatpush1.msra.mxu0 0.0
    %353 = vmatprep.subr.mxu0 0.0
    %354 = vmatpush1.msra.mxu0 0.0
    %355 = vmatprep.subr.mxu0 0.0
    %356 = vmatpush1.msra.mxu0 0.0
    %357 = vmatprep.subr.mxu0 0.0
    %358 = vmatpush1.msra.mxu0 0.0
    %359 = vmatprep.subr.mxu0 0.0
    %360 = vmatpush1.msra.mxu0 0.0
    %361 = vmatprep.subr.mxu0 0.0
    %362 = vmatpush1.msra.mxu0 0.0
    %363 = vmatprep.subr.mxu0 0.0
    %364 = vmatpush1.msra.mxu0 0.0
    %365 = vmatprep.subr.mxu0 0.0
    %366 = vmatpush1.msra.mxu0 0.0
    %367 = vmatprep.subr.mxu0 0.0
    %368 = vmatpush1.msra.mxu0 0.0
    %369 = vmatprep.subr.mxu0 0.0
    %370 = vmatpush1.msra.mxu0 0.0
    %371 = vmatprep.subr.mxu0 0.0
    %372 = vmatpush1.msra.mxu0 0.0
    %373 = vmatprep.subr.mxu0 0.0
    %374 = vmatpush1.msra.mxu0 0.0
    %375 = vmatprep.subr.mxu0 0.0
    %376 = vmatpush1.msra.mxu0 0.0
    %377 = vmatprep.subr.mxu0 0.0
    %378 = vmatpush1.msra.mxu0 0.0
    %379 = vmatprep.subr.mxu0 0.0
    %380 = vmatpush1.msra.mxu0 0.0
    %381 = vmatprep.subr.mxu0 0.0
    %382 = vmatpush1.msra.mxu0 0.0
    %383 = vmatprep.subr.mxu0 0.0
    %384 = vmatpush1.msra.mxu0 0.0
    %385 = vmatprep.subr.mxu0 0.0
    %386 = vmatpush1.msra.mxu0 0.0
    %387 = vmatprep.mubr.f32.mxu0 0.0
    %388 = vmatmul.mubr.f32.gmra.mrb[0].mxu0 %v93
    %v389 = vpop.f32.mrb[0].mxu0
    %v390 = vadd.f32 0.0, %v389
    %v391 = vpop.f32.mrb[0].mxu0
    %392 = vmatprep.mubr.f32.mxu0 0.0
    %393 = vmatmul.mubr.f32.gmra.mrb[0].mxu0 %v96
    %v394 = vpop.f32.mrb[0].mxu0
    %v395 = vadd.f32 0.0, %v394
    %v396 = vpop.f32.mrb[0].mxu0
    %397 = vdwg.mxu0
    %398 = vmatprep.subr.mxu0 0.0
    %399 = vmatpush1.msra.mxu0 %v64
    %400 = vmatprep.subr.mxu0 0.0
    %401 = vmatpush1.msra.mxu0 %v65
    %402 = vmatprep.subr.mxu0 0.0
    %403 = vmatpush1.msra.mxu0 0.0
    %404 = vmatprep.subr.mxu0 0.0
    %405 = vmatpush1.msra.mxu0 0.0
    %406 = vmatprep.subr.mxu0 0.0
    %407 = vmatpush1.msra.mxu0 0.0
    %408 = vmatprep.subr.mxu0 0.0
    %409 = vmatpush1.msra.mxu0 0.0
    %410 = vmatprep.subr.mxu0 0.0
    %411 = vmatpush1.msra.mxu0 0.0
    %412 = vmatprep.subr.mxu0 0.0
    %413 = vmatpush1.msra.mxu0 0.0
    %414 = vmatprep.subr.mxu0 0.0
    %415 = vmatpush1.msra.mxu0 0.0
    %416 = vmatprep.subr.mxu0 0.0
    %417 = vmatpush1.msra.mxu0 0.0
    %418 = vmatprep.subr.mxu0 0.0
    %419 = vmatpush1.msra.mxu0 0.0
    %420 = vmatprep.subr.mxu0 0.0
    %421 = vmatpush1.msra.mxu0 0.0
    %422 = vmatprep.subr.mxu0 0.0
    %423 = vmatpush1.msra.mxu0 0.0
    %424 = vmatprep.subr.mxu0 0.0
    %425 = vmatpush1.msra.mxu0 0.0
    %426 = vmatprep.subr.mxu0 0.0
    %427 = vmatpush1.msra.mxu0 0.0
    %428 = vmatprep.subr.mxu0 0.0
    %429 = vmatpush1.msra.mxu0 0.0
    %430 = vmatprep.subr.mxu0 0.0
    %431 = vmatpush1.msra.mxu0 0.0
    %432 = vmatprep.subr.mxu0 0.0
    %433 = vmatpush1.msra.mxu0 0.0
    %434 = vmatprep.subr.mxu0 0.0
    %435 = vmatpush1.msra.mxu0 0.0
    %436 = vmatprep.subr.mxu0 0.0
    %437 = vmatpush1.msra.mxu0 0.0
    %438 = vmatprep.subr.mxu0 0.0
    %439 = vmatpush1.msra.mxu0 0.0
    %440 = vmatprep.subr.mxu0 0.0
    %441 = vmatpush1.msra.mxu0 0.0
    %442 = vmatprep.subr.mxu0 0.0
    %443 = vmatpush1.msra.mxu0 0.0
    %444 = vmatprep.subr.mxu0 0.0
    %445 = vmatpush1.msra.mxu0 0.0
    %446 = vmatprep.subr.mxu0 0.0
    %447 = vmatpush1.msra.mxu0 0.0
    %448 = vmatprep.subr.mxu0 0.0
    %449 = vmatpush1.msra.mxu0 0.0
    %450 = vmatprep.subr.mxu0 0.0
    %451 = vmatpush1.msra.mxu0 0.0
    %452 = vmatprep.subr.mxu0 0.0
    %453 = vmatpush1.msra.mxu0 0.0
    %454 = vmatprep.subr.mxu0 0.0
    %455 = vmatpush1.msra.mxu0 0.0
    %456 = vmatprep.subr.mxu0 0.0
    %457 = vmatpush1.msra.mxu0 0.0
    %458 = vmatprep.subr.mxu0 0.0
    %459 = vmatpush1.msra.mxu0 0.0
    %460 = vmatprep.subr.mxu0 0.0
    %461 = vmatpush1.msra.mxu0 0.0
    %462 = vmatprep.mubr.f32.mxu0 0.0
    %463 = vmatmul.mubr.f32.gmra.mrb[0].mxu0 %v93
    %v464 = vpop.f32.mrb[0].mxu0
    %v465 = vadd.f32 0.0, %v464
    %v466 = vpop.f32.mrb[0].mxu0
    %467 = vmatprep.mubr.f32.mxu0 0.0
    %468 = vmatmul.mubr.f32.gmra.mrb[0].mxu0 %v96
    %v469 = vpop.f32.mrb[0].mxu0
    %v470 = vadd.f32 0.0, %v469
    %v471 = vpop.f32.mrb[0].mxu0
    %472 = vdwg.mxu0
    %473 = vmatprep.subr.mxu0 0.0
    %474 = vmatpush1.msra.mxu0 %v66
    %475 = vmatprep.subr.mxu0 0.0
    %476 = vmatpush1.msra.mxu0 %v67
    %477 = vmatprep.subr.mxu0 0.0
    %478 = vmatpush1.msra.mxu0 0.0
    %479 = vmatprep.subr.mxu0 0.0
    %480 = vmatpush1.msra.mxu0 0.0
    %481 = vmatprep.subr.mxu0 0.0
    %482 = vmatpush1.msra.mxu0 0.0
    %483 = vmatprep.subr.mxu0 0.0
    %484 = vmatpush1.msra.mxu0 0.0
    %485 = vmatprep.subr.mxu0 0.0
    %486 = vmatpush1.msra.mxu0 0.0
    %487 = vmatprep.subr.mxu0 0.0
    %488 = vmatpush1.msra.mxu0 0.0
    %489 = vmatprep.subr.mxu0 0.0
    %490 = vmatpush1.msra.mxu0 0.0
    %491 = vmatprep.subr.mxu0 0.0
    %492 = vmatpush1.msra.mxu0 0.0
    %493 = vmatprep.subr.mxu0 0.0
    %494 = vmatpush1.msra.mxu0 0.0
    %495 = vmatprep.subr.mxu0 0.0
    %496 = vmatpush1.msra.mxu0 0.0
    %497 = vmatprep.subr.mxu0 0.0
    %498 = vmatpush1.msra.mxu0 0.0
    %499 = vmatprep.subr.mxu0 0.0
    %500 = vmatpush1.msra.mxu0 0.0
    %501 = vmatprep.subr.mxu0 0.0
    %502 = vmatpush1.msra.mxu0 0.0
    %503 = vmatprep.subr.mxu0 0.0
    %504 = vmatpush1.msra.mxu0 0.0
    %505 = vmatprep.subr.mxu0 0.0
    %506 = vmatpush1.msra.mxu0 0.0
    %507 = vmatprep.subr.mxu0 0.0
    %508 = vmatpush1.msra.mxu0 0.0
    %509 = vmatprep.subr.mxu0 0.0
    %510 = vmatpush1.msra.mxu0 0.0
    %511 = vmatprep.subr.mxu0 0.0
    %512 = vmatpush1.msra.mxu0 0.0
    %513 = vmatprep.subr.mxu0 0.0
    %514 = vmatpush1.msra.mxu0 0.0
    %515 = vmatprep.subr.mxu0 0.0
    %516 = vmatpush1.msra.mxu0 0.0
    %517 = vmatprep.subr.mxu0 0.0
    %518 = vmatpush1.msra.mxu0 0.0
    %519 = vmatprep.subr.mxu0 0.0
    %520 = vmatpush1.msra.mxu0 0.0
    %521 = vmatprep.subr.mxu0 0.0
    %522 = vmatpush1.msra.mxu0 0.0
    %523 = vmatprep.subr.mxu0 0.0
    %524 = vmatpush1.msra.mxu0 0.0
    %525 = vmatprep.subr.mxu0 0.0
    %526 = vmatpush1.msra.mxu0 0.0
    %527 = vmatprep.subr.mxu0 0.0
    %528 = vmatpush1.msra.mxu0 0.0
    %529 = vmatprep.subr.mxu0 0.0
    %530 = vmatpush1.msra.mxu0 0.0
    %531 = vmatprep.subr.mxu0 0.0
    %532 = vmatpush1.msra.mxu0 0.0
    %533 = vmatprep.subr.mxu0 0.0
    %534 = vmatpush1.msra.mxu0 0.0
    %535 = vmatprep.subr.mxu0 0.0
    %536 = vmatpush1.msra.mxu0 0.0
    %537 = vmatprep.mubr.f32.mxu0 0.0
    %538 = vmatmul.mubr.f32.gmra.mrb[0].mxu0 %v93
    %v539 = vpop.f32.mrb[0].mxu0
    %v540 = vadd.f32 0.0, %v539
    %v541 = vpop.f32.mrb[0].mxu0
    %542 = vmatprep.mubr.f32.mxu0 0.0
    %543 = vmatmul.mubr.f32.gmra.mrb[0].mxu0 %v96
    %v544 = vpop.f32.mrb[0].mxu0
    %v545 = vadd.f32 0.0, %v544
    %v546 = vpop.f32.mrb[0].mxu0
    %547 = vdwg.mxu0
    %548 = vmatprep.subr.mxu0 0.0
    %549 = vmatpush1.msra.mxu0 %v68
    %550 = vmatprep.subr.mxu0 0.0
    %551 = vmatpush1.msra.mxu0 %v69
    %552 = vmatprep.subr.mxu0 0.0
    %553 = vmatpush1.msra.mxu0 0.0
    %554 = vmatprep.subr.mxu0 0.0
    %555 = vmatpush1.msra.mxu0 0.0
    %556 = vmatprep.subr.mxu0 0.0
    %557 = vmatpush1.msra.mxu0 0.0
    %558 = vmatprep.subr.mxu0 0.0
    %559 = vmatpush1.msra.mxu0 0.0
    %560 = vmatprep.subr.mxu0 0.0
    %561 = vmatpush1.msra.mxu0 0.0
    %562 = vmatprep.subr.mxu0 0.0
    %563 = vmatpush1.msra.mxu0 0.0
    %564 = vmatprep.subr.mxu0 0.0
    %565 = vmatpush1.msra.mxu0 0.0
    %566 = vmatprep.subr.mxu0 0.0
    %567 = vmatpush1.msra.mxu0 0.0
    %568 = vmatprep.subr.mxu0 0.0
    %569 = vmatpush1.msra.mxu0 0.0
    %570 = vmatprep.subr.mxu0 0.0
    %571 = vmatpush1.msra.mxu0 0.0
    %572 = vmatprep.subr.mxu0 0.0
    %573 = vmatpush1.msra.mxu0 0.0
    %574 = vmatprep.subr.mxu0 0.0
    %575 = vmatpush1.msra.mxu0 0.0
    %576 = vmatprep.subr.mxu0 0.0
    %577 = vmatpush1.msra.mxu0 0.0
    %578 = vmatprep.subr.mxu0 0.0
    %579 = vmatpush1.msra.mxu0 0.0
    %580 = vmatprep.subr.mxu0 0.0
    %581 = vmatpush1.msra.mxu0 0.0
    %582 = vmatprep.subr.mxu0 0.0
    %583 = vmatpush1.msra.mxu0 0.0
    %584 = vmatprep.subr.mxu0 0.0
    %585 = vmatpush1.msra.mxu0 0.0
    %586 = vmatprep.subr.mxu0 0.0
    %587 = vmatpush1.msra.mxu0 0.0
    %588 = vmatprep.subr.mxu0 0.0
    %589 = vmatpush1.msra.mxu0 0.0
    %590 = vmatprep.subr.mxu0 0.0
    %591 = vmatpush1.msra.mxu0 0.0
    %592 = vmatprep.subr.mxu0 0.0
    %593 = vmatpush1.msra.mxu0 0.0
    %594 = vmatprep.subr.mxu0 0.0
    %595 = vmatpush1.msra.mxu0 0.0
    %596 = vmatprep.subr.mxu0 0.0
    %597 = vmatpush1.msra.mxu0 0.0
    %598 = vmatprep.subr.mxu0 0.0
    %599 = vmatpush1.msra.mxu0 0.0
    %600 = vmatprep.subr.mxu0 0.0
    %601 = vmatpush1.msra.mxu0 0.0
    %602 = vmatprep.subr.mxu0 0.0
    %603 = vmatpush1.msra.mxu0 0.0
    %604 = vmatprep.subr.mxu0 0.0
    %605 = vmatpush1.msra.mxu0 0.0
    %606 = vmatprep.subr.mxu0 0.0
    %607 = vmatpush1.msra.mxu0 0.0
    %608 = vmatprep.subr.mxu0 0.0
    %609 = vmatpush1.msra.mxu0 0.0
    %610 = vmatprep.subr.mxu0 0.0
    %611 = vmatpush1.msra.mxu0 0.0
    %612 = vmatprep.mubr.f32.mxu0 0.0
    %613 = vmatmul.mubr.f32.gmra.mrb[0].mxu0 %v93
    %v614 = vpop.f32.mrb[0].mxu0
    %v615 = vadd.f32 0.0, %v614
    %v616 = vpop.f32.mrb[0].mxu0
    %617 = vmatprep.mubr.f32.mxu0 0.0
    %618 = vmatmul.mubr.f32.gmra.mrb[0].mxu0 %v96
    %v619 = vpop.f32.mrb[0].mxu0
    %v620 = vadd.f32 0.0, %v619
    %v621 = vpop.f32.mrb[0].mxu0
    %622 = vdwg.mxu0
    %623 = vmatprep.subr.mxu0 0.0
    %624 = vmatpush1.msra.mxu0 %v70
    %625 = vmatprep.subr.mxu0 0.0
    %626 = vmatpush1.msra.mxu0 %v71
    %627 = vmatprep.subr.mxu0 0.0
    %628 = vmatpush1.msra.mxu0 0.0
    %629 = vmatprep.subr.mxu0 0.0
    %630 = vmatpush1.msra.mxu0 0.0
    %631 = vmatprep.subr.mxu0 0.0
    %632 = vmatpush1.msra.mxu0 0.0
    %633 = vmatprep.subr.mxu0 0.0
    %634 = vmatpush1.msra.mxu0 0.0
    %635 = vmatprep.subr.mxu0 0.0
    %636 = vmatpush1.msra.mxu0 0.0
    %637 = vmatprep.subr.mxu0 0.0
    %638 = vmatpush1.msra.mxu0 0.0
    %639 = vmatprep.subr.mxu0 0.0
    %640 = vmatpush1.msra.mxu0 0.0
    %641 = vmatprep.subr.mxu0 0.0
    %642 = vmatpush1.msra.mxu0 0.0
    %643 = vmatprep.subr.mxu0 0.0
    %644 = vmatpush1.msra.mxu0 0.0
    %645 = vmatprep.subr.mxu0 0.0
    %646 = vmatpush1.msra.mxu0 0.0
    %647 = vmatprep.subr.mxu0 0.0
    %648 = vmatpush1.msra.mxu0 0.0
    %649 = vmatprep.subr.mxu0 0.0
    %650 = vmatpush1.msra.mxu0 0.0
    %651 = vmatprep.subr.mxu0 0.0
    %652 = vmatpush1.msra.mxu0 0.0
    %653 = vmatprep.subr.mxu0 0.0
    %654 = vmatpush1.msra.mxu0 0.0
    %655 = vmatprep.subr.mxu0 0.0
    %656 = vmatpush1.msra.mxu0 0.0
    %657 = vmatprep.subr.mxu0 0.0
    %658 = vmatpush1.msra.mxu0 0.0
    %659 = vmatprep.subr.mxu0 0.0
    %660 = vmatpush1.msra.mxu0 0.0
    %661 = vmatprep.subr.mxu0 0.0
    %662 = vmatpush1.msra.mxu0 0.0
    %663 = vmatprep.subr.mxu0 0.0
    %664 = vmatpush1.msra.mxu0 0.0
    %665 = vmatprep.subr.mxu0 0.0
    %666 = vmatpush1.msra.mxu0 0.0
    %667 = vmatprep.subr.mxu0 0.0
    %668 = vmatpush1.msra.mxu0 0.0
    %669 = vmatprep.subr.mxu0 0.0
    %670 = vmatpush1.msra.mxu0 0.0
    %671 = vmatprep.subr.mxu0 0.0
    %672 = vmatpush1.msra.mxu0 0.0
    %673 = vmatprep.subr.mxu0 0.0
    %674 = vmatpush1.msra.mxu0 0.0
    %675 = vmatprep.subr.mxu0 0.0
    %676 = vmatpush1.msra.mxu0 0.0
    %677 = vmatprep.subr.mxu0 0.0
    %678 = vmatpush1.msra.mxu0 0.0
    %679 = vmatprep.subr.mxu0 0.0
    %680 = vmatpush1.msra.mxu0 0.0
    %681 = vmatprep.subr.mxu0 0.0
    %682 = vmatpush1.msra.mxu0 0.0
    %683 = vmatprep.subr.mxu0 0.0
    %684 = vmatpush1.msra.mxu0 0.0
    %685 = vmatprep.subr.mxu0 0.0
    %686 = vmatpush1.msra.mxu0 0.0
    %687 = vmatprep.mubr.f32.mxu0 0.0
    %688 = vmatmul.mubr.f32.gmra.mrb[0].mxu0 %v93
    %v689 = vpop.f32.mrb[0].mxu0
    %v690 = vadd.f32 0.0, %v689
    %v691 = vpop.f32.mrb[0].mxu0
    %692 = vmatprep.mubr.f32.mxu0 0.0
    %693 = vmatmul.mubr.f32.gmra.mrb[0].mxu0 %v96
    %v694 = vpop.f32.mrb[0].mxu0
    %v695 = vadd.f32 0.0, %v694
    %v696 = vpop.f32.mrb[0].mxu0
    %697 = vdwg.mxu0
    %v699 = vsel %vm91, %v165, 0
    %v702 = vsel %vm91, %v170, 0
    %704 = vmatprep.subr.mxu0 0.0
    %705 = vmatpush1.msra.mxu0 %v89
    %706 = vmatprep.subr.mxu0 0.0
    %707 = vmatpush1.msra.mxu0 %v90
    %708 = vmatprep.subr.mxu0 0.0
    %709 = vmatpush1.msra.mxu0 0.0
    %710 = vmatprep.subr.mxu0 0.0
    %711 = vmatpush1.msra.mxu0 0.0
    %712 = vmatprep.subr.mxu0 0.0
    %713 = vmatpush1.msra.mxu0 0.0
    %714 = vmatprep.subr.mxu0 0.0
    %715 = vmatpush1.msra.mxu0 0.0
    %716 = vmatprep.subr.mxu0 0.0
    %717 = vmatpush1.msra.mxu0 0.0
    %718 = vmatprep.subr.mxu0 0.0
    %719 = vmatpush1.msra.mxu0 0.0
    %720 = vmatprep.subr.mxu0 0.0
    %721 = vmatpush1.msra.mxu0 0.0
    %722 = vmatprep.subr.mxu0 0.0
    %723 = vmatpush1.msra.mxu0 0.0
    %724 = vmatprep.subr.mxu0 0.0
    %725 = vmatpush1.msra.mxu0 0.0
    %726 = vmatprep.subr.mxu0 0.0
    %727 = vmatpush1.msra.mxu0 0.0
    %728 = vmatprep.subr.mxu0 0.0
    %729 = vmatpush1.msra.mxu0 0.0
    %730 = vmatprep.subr.mxu0 0.0
    %731 = vmatpush1.msra.mxu0 0.0
    %732 = vmatprep.subr.mxu0 0.0
    %733 = vmatpush1.msra.mxu0 0.0
    %734 = vmatprep.subr.mxu0 0.0
    %735 = vmatpush1.msra.mxu0 0.0
    %736 = vmatprep.subr.mxu0 0.0
    %737 = vmatpush1.msra.mxu0 0.0
    %738 = vmatprep.subr.mxu0 0.0
    %739 = vmatpush1.msra.mxu0 0.0
    %740 = vmatprep.subr.mxu0 0.0
    %741 = vmatpush1.msra.mxu0 0.0
    %742 = vmatprep.subr.mxu0 0.0
    %743 = vmatpush1.msra.mxu0 0.0
    %744 = vmatprep.subr.mxu0 0.0
    %745 = vmatpush1.msra.mxu0 0.0
    %746 = vmatprep.subr.mxu0 0.0
    %747 = vmatpush1.msra.mxu0 0.0
    %748 = vmatprep.subr.mxu0 0.0
    %749 = vmatpush1.msra.mxu0 0.0
    %750 = vmatprep.subr.mxu0 0.0
    %751 = vmatpush1.msra.mxu0 0.0
    %752 = vmatprep.subr.mxu0 0.0
    %753 = vmatpush1.msra.mxu0 0.0
    %754 = vmatprep.subr.mxu0 0.0
    %755 = vmatpush1.msra.mxu0 0.0
    %756 = vmatprep.subr.mxu0 0.0
    %757 = vmatpush1.msra.mxu0 0.0
    %758 = vmatprep.subr.mxu0 0.0
    %759 = vmatpush1.msra.mxu0 0.0
    %760 = vmatprep.subr.mxu0 0.0
    %761 = vmatpush1.msra.mxu0 0.0
    %762 = vmatprep.subr.mxu0 0.0
    %763 = vmatpush1.msra.mxu0 0.0
    %764 = vmatprep.subr.mxu0 0.0
    %765 = vmatpush1.msra.mxu0 0.0
    %766 = vmatprep.subr.mxu0 0.0
    %767 = vmatpush1.msra.mxu0 0.0
    %768 = vmatprep.mubr.f32.mxu0 0.0
    %769 = vmatmul.mubr.f32.gmra.mrb[0].mxu0 %v699
    %v770 = vpop.f32.mrb[0].mxu0
    %v771 = vadd.f32 0.0, %v770
    %v772 = vpop.f32.mrb[0].mxu0
    %773 = vmatprep.mubr.f32.mxu0 0.0
    %774 = vmatmul.mubr.f32.gmra.mrb[0].mxu0 %v702
    %v775 = vpop.f32.mrb[0].mxu0
    %v776 = vadd.f32 0.0, %v775
    %v777 = vpop.f32.mrb[0].mxu0
    %778 = vdwg.mxu0
    %v780 = vsel %vm91, %v240, 0
    %v783 = vsel %vm91, %v245, 0
    %785 = vmatprep.subr.mxu0 0.0
    %786 = vmatpush1.msra.mxu0 %v89
    %787 = vmatprep.subr.mxu0 0.0
    %788 = vmatpush1.msra.mxu0 %v90
    %789 = vmatprep.subr.mxu0 0.0
    %790 = vmatpush1.msra.mxu0 0.0
    %791 = vmatprep.subr.mxu0 0.0
    %792 = vmatpush1.msra.mxu0 0.0
    %793 = vmatprep.subr.mxu0 0.0
    %794 = vmatpush1.msra.mxu0 0.0
    %795 = vmatprep.subr.mxu0 0.0
    %796 = vmatpush1.msra.mxu0 0.0
    %797 = vmatprep.subr.mxu0 0.0
    %798 = vmatpush1.msra.mxu0 0.0
    %799 = vmatprep.subr.mxu0 0.0
    %800 = vmatpush1.msra.mxu0 0.0
    %801 = vmatprep.subr.mxu0 0.0
    %802 = vmatpush1.msra.mxu0 0.0
    %803 = vmatprep.subr.mxu0 0.0
    %804 = vmatpush1.msra.mxu0 0.0
    %805 = vmatprep.subr.mxu0 0.0
    %806 = vmatpush1.msra.mxu0 0.0
    %807 = vmatprep.subr.mxu0 0.0
    %808 = vmatpush1.msra.mxu0 0.0
    %809 = vmatprep.subr.mxu0 0.0
    %810 = vmatpush1.msra.mxu0 0.0
    %811 = vmatprep.subr.mxu0 0.0
    %812 = vmatpush1.msra.mxu0 0.0
    %813 = vmatprep.subr.mxu0 0.0
    %814 = vmatpush1.msra.mxu0 0.0
    %815 = vmatprep.subr.mxu0 0.0
    %816 = vmatpush1.msra.mxu0 0.0
    %817 = vmatprep.subr.mxu0 0.0
    %818 = vmatpush1.msra.mxu0 0.0
    %819 = vmatprep.subr.mxu0 0.0
    %820 = vmatpush1.msra.mxu0 0.0
    %821 = vmatprep.subr.mxu0 0.0
    %822 = vmatpush1.msra.mxu0 0.0
    %823 = vmatprep.subr.mxu0 0.0
    %824 = vmatpush1.msra.mxu0 0.0
    %825 = vmatprep.subr.mxu0 0.0
    %826 = vmatpush1.msra.mxu0 0.0
    %827 = vmatprep.subr.mxu0 0.0
    %828 = vmatpush1.msra.mxu0 0.0
    %829 = vmatprep.subr.mxu0 0.0
    %830 = vmatpush1.msra.mxu0 0.0
    %831 = vmatprep.subr.mxu0 0.0
    %832 = vmatpush1.msra.mxu0 0.0
    %833 = vmatprep.subr.mxu0 0.0
    %834 = vmatpush1.msra.mxu0 0.0
    %835 = vmatprep.subr.mxu0 0.0
    %836 = vmatpush1.msra.mxu0 0.0
    %837 = vmatprep.subr.mxu0 0.0
    %838 = vmatpush1.msra.mxu0 0.0
    %839 = vmatprep.subr.mxu0 0.0
    %840 = vmatpush1.msra.mxu0 0.0
    %841 = vmatprep.subr.mxu0 0.0
    %842 = vmatpush1.msra.mxu0 0.0
    %843 = vmatprep.subr.mxu0 0.0
    %844 = vmatpush1.msra.mxu0 0.0
    %845 = vmatprep.subr.mxu0 0.0
    %846 = vmatpush1.msra.mxu0 0.0
    %847 = vmatprep.subr.mxu0 0.0
    %848 = vmatpush1.msra.mxu0 0.0
    %849 = vmatprep.mubr.f32.mxu0 0.0
    %850 = vmatmul.mubr.f32.gmra.mrb[0].mxu0 %v780
    %v851 = vpop.f32.mrb[0].mxu0
    %v852 = vadd.f32 0.0, %v851
    %v853 = vpop.f32.mrb[0].mxu0
    %854 = vmatprep.mubr.f32.mxu0 0.0
    %855 = vmatmul.mubr.f32.gmra.mrb[0].mxu0 %v783
    %v856 = vpop.f32.mrb[0].mxu0
    %v857 = vadd.f32 0.0, %v856
    %v858 = vpop.f32.mrb[0].mxu0
    %859 = vdwg.mxu0
    %v861 = vsel %vm91, %v315, 0
    %v864 = vsel %vm91, %v320, 0
    %866 = vmatprep.subr.mxu0 0.0
    %867 = vmatpush1.msra.mxu0 %v89
    %868 = vmatprep.subr.mxu0 0.0
    %869 = vmatpush1.msra.mxu0 %v90
    %870 = vmatprep.subr.mxu0 0.0
    %871 = vmatpush1.msra.mxu0 0.0
    %872 = vmatprep.subr.mxu0 0.0
    %873 = vmatpush1.msra.mxu0 0.0
    %874 = vmatprep.subr.mxu0 0.0
    %875 = vmatpush1.msra.mxu0 0.0
    %876 = vmatprep.subr.mxu0 0.0
    %877 = vmatpush1.msra.mxu0 0.0
    %878 = vmatprep.subr.mxu0 0.0
    %879 = vmatpush1.msra.mxu0 0.0
    %880 = vmatprep.subr.mxu0 0.0
    %881 = vmatpush1.msra.mxu0 0.0
    %882 = vmatprep.subr.mxu0 0.0
    %883 = vmatpush1.msra.mxu0 0.0
    %884 = vmatprep.subr.mxu0 0.0
    %885 = vmatpush1.msra.mxu0 0.0
    %886 = vmatprep.subr.mxu0 0.0
    %887 = vmatpush1.msra.mxu0 0.0
    %888 = vmatprep.subr.mxu0 0.0
    %889 = vmatpush1.msra.mxu0 0.0
    %890 = vmatprep.subr.mxu0 0.0
    %891 = vmatpush1.msra.mxu0 0.0
    %892 = vmatprep.subr.mxu0 0.0
    %893 = vmatpush1.msra.mxu0 0.0
    %894 = vmatprep.subr.mxu0 0.0
    %895 = vmatpush1.msra.mxu0 0.0
    %896 = vmatprep.subr.mxu0 0.0
    %897 = vmatpush1.msra.mxu0 0.0
    %898 = vmatprep.subr.mxu0 0.0
    %899 = vmatpush1.msra.mxu0 0.0
    %900 = vmatprep.subr.mxu0 0.0
    %901 = vmatpush1.msra.mxu0 0.0
    %902 = vmatprep.subr.mxu0 0.0
    %903 = vmatpush1.msra.mxu0 0.0
    %904 = vmatprep.subr.mxu0 0.0
    %905 = vmatpush1.msra.mxu0 0.0
    %906 = vmatprep.subr.mxu0 0.0
    %907 = vmatpush1.msra.mxu0 0.0
    %908 = vmatprep.subr.mxu0 0.0
    %909 = vmatpush1.msra.mxu0 0.0
    %910 = vmatprep.subr.mxu0 0.0
    %911 = vmatpush1.msra.mxu0 0.0
    %912 = vmatprep.subr.mxu0 0.0
    %913 = vmatpush1.msra.mxu0 0.0
    %914 = vmatprep.subr.mxu0 0.0
    %915 = vmatpush1.msra.mxu0 0.0
    %916 = vmatprep.subr.mxu0 0.0
    %917 = vmatpush1.msra.mxu0 0.0
    %918 = vmatprep.subr.mxu0 0.0
    %919 = vmatpush1.msra.mxu0 0.0
    %920 = vmatprep.subr.mxu0 0.0
    %921 = vmatpush1.msra.mxu0 0.0
    %922 = vmatprep.subr.mxu0 0.0
    %923 = vmatpush1.msra.mxu0 0.0
    %924 = vmatprep.subr.mxu0 0.0
    %925 = vmatpush1.msra.mxu0 0.0
    %926 = vmatprep.subr.mxu0 0.0
    %927 = vmatpush1.msra.mxu0 0.0
    %928 = vmatprep.subr.mxu0 0.0
    %929 = vmatpush1.msra.mxu0 0.0
    %930 = vmatprep.mubr.f32.mxu0 0.0
    %931 = vmatmul.mubr.f32.gmra.mrb[0].mxu0 %v861
    %v932 = vpop.f32.mrb[0].mxu0
    %v933 = vadd.f32 0.0, %v932
    %v934 = vpop.f32.mrb[0].mxu0
    %935 = vmatprep.mubr.f32.mxu0 0.0
    %936 = vmatmul.mubr.f32.gmra.mrb[0].mxu0 %v864
    %v937 = vpop.f32.mrb[0].mxu0
    %v938 = vadd.f32 0.0, %v937
    %v939 = vpop.f32.mrb[0].mxu0
    %940 = vdwg.mxu0
    %v942 = vsel %vm91, %v390, 0
    %v945 = vsel %vm91, %v395, 0
    %947 = vmatprep.subr.mxu0 0.0
    %948 = vmatpush1.msra.mxu0 %v89
    %949 = vmatprep.subr.mxu0 0.0
    %950 = vmatpush1.msra.mxu0 %v90
    %951 = vmatprep.subr.mxu0 0.0
    %952 = vmatpush1.msra.mxu0 0.0
    %953 = vmatprep.subr.mxu0 0.0
    %954 = vmatpush1.msra.mxu0 0.0
    %955 = vmatprep.subr.mxu0 0.0
    %956 = vmatpush1.msra.mxu0 0.0
    %957 = vmatprep.subr.mxu0 0.0
    %958 = vmatpush1.msra.mxu0 0.0
    %959 = vmatprep.subr.mxu0 0.0
    %960 = vmatpush1.msra.mxu0 0.0
    %961 = vmatprep.subr.mxu0 0.0
    %962 = vmatpush1.msra.mxu0 0.0
    %963 = vmatprep.subr.mxu0 0.0
    %964 = vmatpush1.msra.mxu0 0.0
    %965 = vmatprep.subr.mxu0 0.0
    %966 = vmatpush1.msra.mxu0 0.0
    %967 = vmatprep.subr.mxu0 0.0
    %968 = vmatpush1.msra.mxu0 0.0
    %969 = vmatprep.subr.mxu0 0.0
    %970 = vmatpush1.msra.mxu0 0.0
    %971 = vmatprep.subr.mxu0 0.0
    %972 = vmatpush1.msra.mxu0 0.0
    %973 = vmatprep.subr.mxu0 0.0
    %974 = vmatpush1.msra.mxu0 0.0
    %975 = vmatprep.subr.mxu0 0.0
    %976 = vmatpush1.msra.mxu0 0.0
    %977 = vmatprep.subr.mxu0 0.0
    %978 = vmatpush1.msra.mxu0 0.0
    %979 = vmatprep.subr.mxu0 0.0
    %980 = vmatpush1.msra.mxu0 0.0
    %981 = vmatprep.subr.mxu0 0.0
    %982 = vmatpush1.msra.mxu0 0.0
    %983 = vmatprep.subr.mxu0 0.0
    %984 = vmatpush1.msra.mxu0 0.0
    %985 = vmatprep.subr.mxu0 0.0
    %986 = vmatpush1.msra.mxu0 0.0
    %987 = vmatprep.subr.mxu0 0.0
    %988 = vmatpush1.msra.mxu0 0.0
    %989 = vmatprep.subr.mxu0 0.0
    %990 = vmatpush1.msra.mxu0 0.0
    %991 = vmatprep.subr.mxu0 0.0
    %992 = vmatpush1.msra.mxu0 0.0
    %993 = vmatprep.subr.mxu0 0.0
    %994 = vmatpush1.msra.mxu0 0.0
    %995 = vmatprep.subr.mxu0 0.0
    %996 = vmatpush1.msra.mxu0 0.0
    %997 = vmatprep.subr.mxu0 0.0
    %998 = vmatpush1.msra.mxu0 0.0
    %999 = vmatprep.subr.mxu0 0.0
    %1000 = vmatpush1.msra.mxu0 0.0
    %1001 = vmatprep.subr.mxu0 0.0
    %1002 = vmatpush1.msra.mxu0 0.0
    %1003 = vmatprep.subr.mxu0 0.0
    %1004 = vmatpush1.msra.mxu0 0.0
    %1005 = vmatprep.subr.mxu0 0.0
    %1006 = vmatpush1.msra.mxu0 0.0
    %1007 = vmatprep.subr.mxu0 0.0
    %1008 = vmatpush1.msra.mxu0 0.0
    %1009 = vmatprep.subr.mxu0 0.0
    %1010 = vmatpush1.msra.mxu0 0.0
    %1011 = vmatprep.mubr.f32.mxu0 0.0
    %1012 = vmatmul.mubr.f32.gmra.mrb[0].mxu0 %v942
    %v1013 = vpop.f32.mrb[0].mxu0
    %v1014 = vadd.f32 0.0, %v1013
    %v1015 = vpop.f32.mrb[0].mxu0
    %1016 = vmatprep.mubr.f32.mxu0 0.0
    %1017 = vmatmul.mubr.f32.gmra.mrb[0].mxu0 %v945
    %v1018 = vpop.f32.mrb[0].mxu0
    %v1019 = vadd.f32 0.0, %v1018
    %v1020 = vpop.f32.mrb[0].mxu0
    %1021 = vdwg.mxu0
    %v1023 = vsel %vm91, %v465, 0
    %v1026 = vsel %vm91, %v470, 0
    %1028 = vmatprep.subr.mxu0 0.0
    %1029 = vmatpush1.msra.mxu0 %v89
    %1030 = vmatprep.subr.mxu0 0.0
    %1031 = vmatpush1.msra.mxu0 %v90
    %1032 = vmatprep.subr.mxu0 0.0
    %1033 = vmatpush1.msra.mxu0 0.0
    %1034 = vmatprep.subr.mxu0 0.0
    %1035 = vmatpush1.msra.mxu0 0.0
    %1036 = vmatprep.subr.mxu0 0.0
    %1037 = vmatpush1.msra.mxu0 0.0
    %1038 = vmatprep.subr.mxu0 0.0
    %1039 = vmatpush1.msra.mxu0 0.0
    %1040 = vmatprep.subr.mxu0 0.0
    %1041 = vmatpush1.msra.mxu0 0.0
    %1042 = vmatprep.subr.mxu0 0.0
    %1043 = vmatpush1.msra.mxu0 0.0
    %1044 = vmatprep.subr.mxu0 0.0
    %1045 = vmatpush1.msra.mxu0 0.0
    %1046 = vmatprep.subr.mxu0 0.0
    %1047 = vmatpush1.msra.mxu0 0.0
    %1048 = vmatprep.subr.mxu0 0.0
    %1049 = vmatpush1.msra.mxu0 0.0
    %1050 = vmatprep.subr.mxu0 0.0
    %1051 = vmatpush1.msra.mxu0 0.0
    %1052 = vmatprep.subr.mxu0 0.0
    %1053 = vmatpush1.msra.mxu0 0.0
    %1054 = vmatprep.subr.mxu0 0.0
    %1055 = vmatpush1.msra.mxu0 0.0
    %1056 = vmatprep.subr.mxu0 0.0
    %1057 = vmatpush1.msra.mxu0 0.0
    %1058 = vmatprep.subr.mxu0 0.0
    %1059 = vmatpush1.msra.mxu0 0.0
    %1060 = vmatprep.subr.mxu0 0.0
    %1061 = vmatpush1.msra.mxu0 0.0
    %1062 = vmatprep.subr.mxu0 0.0
    %1063 = vmatpush1.msra.mxu0 0.0
    %1064 = vmatprep.subr.mxu0 0.0
    %1065 = vmatpush1.msra.mxu0 0.0
    %1066 = vmatprep.subr.mxu0 0.0
    %1067 = vmatpush1.msra.mxu0 0.0
    %1068 = vmatprep.subr.mxu0 0.0
    %1069 = vmatpush1.msra.mxu0 0.0
    %1070 = vmatprep.subr.mxu0 0.0
    %1071 = vmatpush1.msra.mxu0 0.0
    %1072 = vmatprep.subr.mxu0 0.0
    %1073 = vmatpush1.msra.mxu0 0.0
    %1074 = vmatprep.subr.mxu0 0.0
    %1075 = vmatpush1.msra.mxu0 0.0
    %1076 = vmatprep.subr.mxu0 0.0
    %1077 = vmatpush1.msra.mxu0 0.0
    %1078 = vmatprep.subr.mxu0 0.0
    %1079 = vmatpush1.msra.mxu0 0.0
    %1080 = vmatprep.subr.mxu0 0.0
    %1081 = vmatpush1.msra.mxu0 0.0
    %1082 = vmatprep.subr.mxu0 0.0
    %1083 = vmatpush1.msra.mxu0 0.0
    %1084 = vmatprep.subr.mxu0 0.0
    %1085 = vmatpush1.msra.mxu0 0.0
    %1086 = vmatprep.subr.mxu0 0.0
    %1087 = vmatpush1.msra.mxu0 0.0
    %1088 = vmatprep.subr.mxu0 0.0
    %1089 = vmatpush1.msra.mxu0 0.0
    %1090 = vmatprep.subr.mxu0 0.0
    %1091 = vmatpush1.msra.mxu0 0.0
    %1092 = vmatprep.mubr.f32.mxu0 0.0
    %1093 = vmatmul.mubr.f32.gmra.mrb[0].mxu0 %v1023
    %v1094 = vpop.f32.mrb[0].mxu0
    %v1095 = vadd.f32 0.0, %v1094
    %v1096 = vpop.f32.mrb[0].mxu0
    %1097 = vmatprep.mubr.f32.mxu0 0.0
    %1098 = vmatmul.mubr.f32.gmra.mrb[0].mxu0 %v1026
    %v1099 = vpop.f32.mrb[0].mxu0
    %v1100 = vadd.f32 0.0, %v1099
    %v1101 = vpop.f32.mrb[0].mxu0
    %1102 = vdwg.mxu0
    %v1104 = vsel %vm91, %v540, 0
    %v1107 = vsel %vm91, %v545, 0
    %1109 = vmatprep.subr.mxu0 0.0
    %1110 = vmatpush1.msra.mxu0 %v89
    %1111 = vmatprep.subr.mxu0 0.0
    %1112 = vmatpush1.msra.mxu0 %v90
    %1113 = vmatprep.subr.mxu0 0.0
    %1114 = vmatpush1.msra.mxu0 0.0
    %1115 = vmatprep.subr.mxu0 0.0
    %1116 = vmatpush1.msra.mxu0 0.0
    %1117 = vmatprep.subr.mxu0 0.0
    %1118 = vmatpush1.msra.mxu0 0.0
    %1119 = vmatprep.subr.mxu0 0.0
    %1120 = vmatpush1.msra.mxu0 0.0
    %1121 = vmatprep.subr.mxu0 0.0
    %1122 = vmatpush1.msra.mxu0 0.0
    %1123 = vmatprep.subr.mxu0 0.0
    %1124 = vmatpush1.msra.mxu0 0.0
    %1125 = vmatprep.subr.mxu0 0.0
    %1126 = vmatpush1.msra.mxu0 0.0
    %1127 = vmatprep.subr.mxu0 0.0
    %1128 = vmatpush1.msra.mxu0 0.0
    %1129 = vmatprep.subr.mxu0 0.0
    %1130 = vmatpush1.msra.mxu0 0.0
    %1131 = vmatprep.subr.mxu0 0.0
    %1132 = vmatpush1.msra.mxu0 0.0
    %1133 = vmatprep.subr.mxu0 0.0
    %1134 = vmatpush1.msra.mxu0 0.0
    %1135 = vmatprep.subr.mxu0 0.0
    %1136 = vmatpush1.msra.mxu0 0.0
    %1137 = vmatprep.subr.mxu0 0.0
    %1138 = vmatpush1.msra.mxu0 0.0
    %1139 = vmatprep.subr.mxu0 0.0
    %1140 = vmatpush1.msra.mxu0 0.0
    %1141 = vmatprep.subr.mxu0 0.0
    %1142 = vmatpush1.msra.mxu0 0.0
    %1143 = vmatprep.subr.mxu0 0.0
    %1144 = vmatpush1.msra.mxu0 0.0
    %1145 = vmatprep.subr.mxu0 0.0
    %1146 = vmatpush1.msra.mxu0 0.0
    %1147 = vmatprep.subr.mxu0 0.0
    %1148 = vmatpush1.msra.mxu0 0.0
    %1149 = vmatprep.subr.mxu0 0.0
    %1150 = vmatpush1.msra.mxu0 0.0
    %1151 = vmatprep.subr.mxu0 0.0
    %1152 = vmatpush1.msra.mxu0 0.0
    %1153 = vmatprep.subr.mxu0 0.0
    %1154 = vmatpush1.msra.mxu0 0.0
    %1155 = vmatprep.subr.mxu0 0.0
    %1156 = vmatpush1.msra.mxu0 0.0
    %1157 = vmatprep.subr.mxu0 0.0
    %1158 = vmatpush1.msra.mxu0 0.0
    %1159 = vmatprep.subr.mxu0 0.0
    %1160 = vmatpush1.msra.mxu0 0.0
    %1161 = vmatprep.subr.mxu0 0.0
    %1162 = vmatpush1.msra.mxu0 0.0
    %1163 = vmatprep.subr.mxu0 0.0
    %1164 = vmatpush1.msra.mxu0 0.0
    %1165 = vmatprep.subr.mxu0 0.0
    %1166 = vmatpush1.msra.mxu0 0.0
    %1167 = vmatprep.subr.mxu0 0.0
    %1168 = vmatpush1.msra.mxu0 0.0
    %1169 = vmatprep.subr.mxu0 0.0
    %1170 = vmatpush1.msra.mxu0 0.0
    %1171 = vmatprep.subr.mxu0 0.0
    %1172 = vmatpush1.msra.mxu0 0.0
    %1173 = vmatprep.mubr.f32.mxu0 0.0
    %1174 = vmatmul.mubr.f32.gmra.mrb[0].mxu0 %v1104
    %v1175 = vpop.f32.mrb[0].mxu0
    %v1176 = vadd.f32 0.0, %v1175
    %v1177 = vpop.f32.mrb[0].mxu0
    %1178 = vmatprep.mubr.f32.mxu0 0.0
    %1179 = vmatmul.mubr.f32.gmra.mrb[0].mxu0 %v1107
    %v1180 = vpop.f32.mrb[0].mxu0
    %v1181 = vadd.f32 0.0, %v1180
    %v1182 = vpop.f32.mrb[0].mxu0
    %1183 = vdwg.mxu0
    %v1185 = vsel %vm91, %v615, 0
    %v1188 = vsel %vm91, %v620, 0
    %1190 = vmatprep.subr.mxu0 0.0
    %1191 = vmatpush1.msra.mxu0 %v89
    %1192 = vmatprep.subr.mxu0 0.0
    %1193 = vmatpush1.msra.mxu0 %v90
    %1194 = vmatprep.subr.mxu0 0.0
    %1195 = vmatpush1.msra.mxu0 0.0
    %1196 = vmatprep.subr.mxu0 0.0
    %1197 = vmatpush1.msra.mxu0 0.0
    %1198 = vmatprep.subr.mxu0 0.0
    %1199 = vmatpush1.msra.mxu0 0.0
    %1200 = vmatprep.subr.mxu0 0.0
    %1201 = vmatpush1.msra.mxu0 0.0
    %1202 = vmatprep.subr.mxu0 0.0
    %1203 = vmatpush1.msra.mxu0 0.0
    %1204 = vmatprep.subr.mxu0 0.0
    %1205 = vmatpush1.msra.mxu0 0.0
    %1206 = vmatprep.subr.mxu0 0.0
    %1207 = vmatpush1.msra.mxu0 0.0
    %1208 = vmatprep.subr.mxu0 0.0
    %1209 = vmatpush1.msra.mxu0 0.0
    %1210 = vmatprep.subr.mxu0 0.0
    %1211 = vmatpush1.msra.mxu0 0.0
    %1212 = vmatprep.subr.mxu0 0.0
    %1213 = vmatpush1.msra.mxu0 0.0
    %1214 = vmatprep.subr.mxu0 0.0
    %1215 = vmatpush1.msra.mxu0 0.0
    %1216 = vmatprep.subr.mxu0 0.0
    %1217 = vmatpush1.msra.mxu0 0.0
    %1218 = vmatprep.subr.mxu0 0.0
    %1219 = vmatpush1.msra.mxu0 0.0
    %1220 = vmatprep.subr.mxu0 0.0
    %1221 = vmatpush1.msra.mxu0 0.0
    %1222 = vmatprep.subr.mxu0 0.0
    %1223 = vmatpush1.msra.mxu0 0.0
    %1224 = vmatprep.subr.mxu0 0.0
    %1225 = vmatpush1.msra.mxu0 0.0
    %1226 = vmatprep.subr.mxu0 0.0
    %1227 = vmatpush1.msra.mxu0 0.0
    %1228 = vmatprep.subr.mxu0 0.0
    %1229 = vmatpush1.msra.mxu0 0.0
    %1230 = vmatprep.subr.mxu0 0.0
    %1231 = vmatpush1.msra.mxu0 0.0
    %1232 = vmatprep.subr.mxu0 0.0
    %1233 = vmatpush1.msra.mxu0 0.0
    %1234 = vmatprep.subr.mxu0 0.0
    %1235 = vmatpush1.msra.mxu0 0.0
    %1236 = vmatprep.subr.mxu0 0.0
    %1237 = vmatpush1.msra.mxu0 0.0
    %1238 = vmatprep.subr.mxu0 0.0
    %1239 = vmatpush1.msra.mxu0 0.0
    %1240 = vmatprep.subr.mxu0 0.0
    %1241 = vmatpush1.msra.mxu0 0.0
    %1242 = vmatprep.subr.mxu0 0.0
    %1243 = vmatpush1.msra.mxu0 0.0
    %1244 = vmatprep.subr.mxu0 0.0
    %1245 = vmatpush1.msra.mxu0 0.0
    %1246 = vmatprep.subr.mxu0 0.0
    %1247 = vmatpush1.msra.mxu0 0.0
    %1248 = vmatprep.subr.mxu0 0.0
    %1249 = vmatpush1.msra.mxu0 0.0
    %1250 = vmatprep.subr.mxu0 0.0
    %1251 = vmatpush1.msra.mxu0 0.0
    %1252 = vmatprep.subr.mxu0 0.0
    %1253 = vmatpush1.msra.mxu0 0.0
    %1254 = vmatprep.mubr.f32.mxu0 0.0
    %1255 = vmatmul.mubr.f32.gmra.mrb[0].mxu0 %v1185
    %v1256 = vpop.f32.mrb[0].mxu0
    %v1257 = vadd.f32 0.0, %v1256
    %v1258 = vpop.f32.mrb[0].mxu0
    %1259 = vmatprep.mubr.f32.mxu0 0.0
    %1260 = vmatmul.mubr.f32.gmra.mrb[0].mxu0 %v1188
    %v1261 = vpop.f32.mrb[0].mxu0
    %v1262 = vadd.f32 0.0, %v1261
    %v1263 = vpop.f32.mrb[0].mxu0
    %1264 = vdwg.mxu0
    %v1266 = vsel %vm91, %v690, 0
    %v1269 = vsel %vm91, %v695, 0
    %1271 = vmatprep.subr.mxu0 0.0
    %1272 = vmatpush1.msra.mxu0 %v89
    %1273 = vmatprep.subr.mxu0 0.0
    %1274 = vmatpush1.msra.mxu0 %v90
    %1275 = vmatprep.subr.mxu0 0.0
    %1276 = vmatpush1.msra.mxu0 0.0
    %1277 = vmatprep.subr.mxu0 0.0
    %1278 = vmatpush1.msra.mxu0 0.0
    %1279 = vmatprep.subr.mxu0 0.0
    %1280 = vmatpush1.msra.mxu0 0.0
    %1281 = vmatprep.subr.mxu0 0.0
    %1282 = vmatpush1.msra.mxu0 0.0
    %1283 = vmatprep.subr.mxu0 0.0
    %1284 = vmatpush1.msra.mxu0 0.0
    %1285 = vmatprep.subr.mxu0 0.0
    %1286 = vmatpush1.msra.mxu0 0.0
    %1287 = vmatprep.subr.mxu0 0.0
    %1288 = vmatpush1.msra.mxu0 0.0
    %1289 = vmatprep.subr.mxu0 0.0
    %1290 = vmatpush1.msra.mxu0 0.0
    %1291 = vmatprep.subr.mxu0 0.0
    %1292 = vmatpush1.msra.mxu0 0.0
    %1293 = vmatprep.subr.mxu0 0.0
    %1294 = vmatpush1.msra.mxu0 0.0
    %1295 = vmatprep.subr.mxu0 0.0
    %1296 = vmatpush1.msra.mxu0 0.0
    %1297 = vmatprep.subr.mxu0 0.0
    %1298 = vmatpush1.msra.mxu0 0.0
    %1299 = vmatprep.subr.mxu0 0.0
    %1300 = vmatpush1.msra.mxu0 0.0
    %1301 = vmatprep.subr.mxu0 0.0
    %1302 = vmatpush1.msra.mxu0 0.0
    %1303 = vmatprep.subr.mxu0 0.0
    %1304 = vmatpush1.msra.mxu0 0.0
    %1305 = vmatprep.subr.mxu0 0.0
    %1306 = vmatpush1.msra.mxu0 0.0
    %1307 = vmatprep.subr.mxu0 0.0
    %1308 = vmatpush1.msra.mxu0 0.0
    %1309 = vmatprep.subr.mxu0 0.0
    %1310 = vmatpush1.msra.mxu0 0.0
    %1311 = vmatprep.subr.mxu0 0.0
    %1312 = vmatpush1.msra.mxu0 0.0
    %1313 = vmatprep.subr.mxu0 0.0
    %1314 = vmatpush1.msra.mxu0 0.0
    %1315 = vmatprep.subr.mxu0 0.0
    %1316 = vmatpush1.msra.mxu0 0.0
    %1317 = vmatprep.subr.mxu0 0.0
    %1318 = vmatpush1.msra.mxu0 0.0
    %1319 = vmatprep.subr.mxu0 0.0
    %1320 = vmatpush1.msra.mxu0 0.0
    %1321 = vmatprep.subr.mxu0 0.0
    %1322 = vmatpush1.msra.mxu0 0.0
    %1323 = vmatprep.subr.mxu0 0.0
    %1324 = vmatpush1.msra.mxu0 0.0
    %1325 = vmatprep.subr.mxu0 0.0
    %1326 = vmatpush1.msra.mxu0 0.0
    %1327 = vmatprep.subr.mxu0 0.0
    %1328 = vmatpush1.msra.mxu0 0.0
    %1329 = vmatprep.subr.mxu0 0.0
    %1330 = vmatpush1.msra.mxu0 0.0
    %1331 = vmatprep.subr.mxu0 0.0
    %1332 = vmatpush1.msra.mxu0 0.0
    %1333 = vmatprep.subr.mxu0 0.0
    %1334 = vmatpush1.msra.mxu0 0.0
    %1335 = vmatprep.mubr.f32.mxu0 0.0
    %1336 = vmatmul.mubr.f32.gmra.mrb[0].mxu0 %v1266
    %v1337 = vpop.f32.mrb[0].mxu0
    %v1338 = vadd.f32 0.0, %v1337
    %v1339 = vpop.f32.mrb[0].mxu0
    %1340 = vmatprep.mubr.f32.mxu0 0.0
    %1341 = vmatmul.mubr.f32.gmra.mrb[0].mxu0 %v1269
    %v1342 = vpop.f32.mrb[0].mxu0
    %v1343 = vadd.f32 0.0, %v1342
    %v1344 = vpop.f32.mrb[0].mxu0
    %1345 = vdwg.mxu0
    %v1346 = vmul.f32 %v771, 0.0010405828
    %v1347 = vmul.f32 %v776, 0.0010405828
    %v1348 = vmul.f32 %v852, 0.0010405828
    %v1349 = vmul.f32 %v857, 0.0010405828
    %v1350 = vmul.f32 %v933, 0.0010405828
    %v1351 = vmul.f32 %v938, 0.0010405828
    %v1352 = vmul.f32 %v1014, 0.0010405828
    %v1353 = vmul.f32 %v1019, 0.0010405828
    %v1354 = vmul.f32 %v1095, 0.0010405828
    %v1355 = vmul.f32 %v1100, 0.0010405828
    %v1356 = vmul.f32 %v1176, 0.0010405828
    %v1357 = vmul.f32 %v1181, 0.0010405828
    %v1358 = vmul.f32 %v1257, 0.0010405828
    %v1359 = vmul.f32 %v1262, 0.0010405828
    %v1360 = vmul.f32 %v1338, 0.0010405828
    %v1361 = vmul.f32 %v1343, 0.0010405828
    %v1362 = vsub.f32 %v1346, %v56
    %v1363 = vsub.f32 %v1347, %v57
    %v1364 = vsub.f32 %v1348, %v58
    %v1365 = vsub.f32 %v1349, %v59
    %v1366 = vsub.f32 %v1350, %v60
    %v1367 = vsub.f32 %v1351, %v61
    %v1368 = vsub.f32 %v1352, %v62
    %v1369 = vsub.f32 %v1353, %v63
    %v1370 = vsub.f32 %v1354, %v64
    %v1371 = vsub.f32 %v1355, %v65
    %v1372 = vsub.f32 %v1356, %v66
    %v1373 = vsub.f32 %v1357, %v67
    %v1374 = vsub.f32 %v1358, %v68
    %v1375 = vsub.f32 %v1359, %v69
    %v1376 = vsub.f32 %v1360, %v70
    %v1377 = vsub.f32 %v1361, %v71
    %v1378 = vand.u32 2147483647, %v1362
    %v1379 = vand.u32 2147483647, %v1363
    %v1380 = vand.u32 2147483647, %v1364
    %v1381 = vand.u32 2147483647, %v1365
    %v1382 = vand.u32 2147483647, %v1366
    %v1383 = vand.u32 2147483647, %v1367
    %v1384 = vand.u32 2147483647, %v1368
    %v1385 = vand.u32 2147483647, %v1369
    %v1386 = vand.u32 2147483647, %v1370
    %v1387 = vand.u32 2147483647, %v1371
    %v1388 = vand.u32 2147483647, %v1372
    %v1389 = vand.u32 2147483647, %v1373
    %v1390 = vand.u32 2147483647, %v1374
    %v1391 = vand.u32 2147483647, %v1375
    %v1392 = vand.u32 2147483647, %v1376
    %v1393 = vand.u32 2147483647, %v1377
    %v1394 = vmul.f32 %v1378, 5.0
    %v1395 = vmul.f32 %v1379, 5.0
    %v1396 = vmul.f32 %v1380, 5.0
    %v1397 = vmul.f32 %v1381, 5.0
    %v1398 = vmul.f32 %v1382, 5.0
    %v1399 = vmul.f32 %v1383, 5.0
    %v1400 = vmul.f32 %v1384, 5.0
    %v1401 = vmul.f32 %v1385, 5.0
    %v1402 = vmul.f32 %v1386, 5.0
    %v1403 = vmul.f32 %v1387, 5.0
    %v1404 = vmul.f32 %v1388, 5.0
    %v1405 = vmul.f32 %v1389, 5.0
    %v1406 = vmul.f32 %v1390, 5.0
    %v1407 = vmul.f32 %v1391, 5.0
    %v1408 = vmul.f32 %v1392, 5.0
    %v1409 = vmul.f32 %v1393, 5.0
    %v1410 = vadd.f32 %v1394, 1.0
    %v1411 = vadd.f32 %v1395, 1.0
    %v1412 = vadd.f32 %v1396, 1.0
    %v1413 = vadd.f32 %v1397, 1.0
    %v1414 = vadd.f32 %v1398, 1.0
    %v1415 = vadd.f32 %v1399, 1.0
    %v1416 = vadd.f32 %v1400, 1.0
    %v1417 = vadd.f32 %v1401, 1.0
    %v1418 = vadd.f32 %v1402, 1.0
    %v1419 = vadd.f32 %v1403, 1.0
    %v1420 = vadd.f32 %v1404, 1.0
    %v1421 = vadd.f32 %v1405, 1.0
    %v1422 = vadd.f32 %v1406, 1.0
    %v1423 = vadd.f32 %v1407, 1.0
    %v1424 = vadd.f32 %v1408, 1.0
    %v1425 = vadd.f32 %v1409, 1.0
    %v1426 = vmax.f32 %v40, 0.0
    %v1427 = vmax.f32 %v41, 0.0
    %v1428 = vmax.f32 %v42, 0.0
    %v1429 = vmax.f32 %v43, 0.0
    %v1430 = vmax.f32 %v44, 0.0
    %v1431 = vmax.f32 %v45, 0.0
    %v1432 = vmax.f32 %v46, 0.0
    %v1433 = vmax.f32 %v47, 0.0
    %v1434 = vmax.f32 %v48, 0.0
    %v1435 = vmax.f32 %v49, 0.0
    %v1436 = vmax.f32 %v50, 0.0
    %v1437 = vmax.f32 %v51, 0.0
    %v1438 = vmax.f32 %v52, 0.0
    %v1439 = vmax.f32 %v53, 0.0
    %v1440 = vmax.f32 %v54, 0.0
    %v1441 = vmax.f32 %v55, 0.0
    %v1442 = vmul.f32 %v40, %v56
    %v1443 = vmul.f32 %v41, %v57
    %v1444 = vmul.f32 %v42, %v58
    %v1445 = vmul.f32 %v43, %v59
    %v1446 = vmul.f32 %v44, %v60
    %v1447 = vmul.f32 %v45, %v61
    %v1448 = vmul.f32 %v46, %v62
    %v1449 = vmul.f32 %v47, %v63
    %v1450 = vmul.f32 %v48, %v64
    %v1451 = vmul.f32 %v49, %v65
    %v1452 = vmul.f32 %v50, %v66
    %v1453 = vmul.f32 %v51, %v67
    %v1454 = vmul.f32 %v52, %v68
    %v1455 = vmul.f32 %v53, %v69
    %v1456 = vmul.f32 %v54, %v70
    %v1457 = vmul.f32 %v55, %v71
    %v1458 = vsub.f32 %v1426, %v1442
    %v1459 = vsub.f32 %v1427, %v1443
    %v1460 = vsub.f32 %v1428, %v1444
    %v1461 = vsub.f32 %v1429, %v1445
    %v1462 = vsub.f32 %v1430, %v1446
    %v1463 = vsub.f32 %v1431, %v1447
    %v1464 = vsub.f32 %v1432, %v1448
    %v1465 = vsub.f32 %v1433, %v1449
    %v1466 = vsub.f32 %v1434, %v1450
    %v1467 = vsub.f32 %v1435, %v1451
    %v1468 = vsub.f32 %v1436, %v1452
    %v1469 = vsub.f32 %v1437, %v1453
    %v1470 = vsub.f32 %v1438, %v1454
    %v1471 = vsub.f32 %v1439, %v1455
    %v1472 = vsub.f32 %v1440, %v1456
    %v1473 = vsub.f32 %v1441, %v1457
    %v1474 = vand.u32 2147483647, %v40
    %v1475 = vand.u32 2147483647, %v41
    %v1476 = vand.u32 2147483647, %v42
    %v1477 = vand.u32 2147483647, %v43
    %v1478 = vand.u32 2147483647, %v44
    %v1479 = vand.u32 2147483647, %v45
    %v1480 = vand.u32 2147483647, %v46
    %v1481 = vand.u32 2147483647, %v47
    %v1482 = vand.u32 2147483647, %v48
    %v1483 = vand.u32 2147483647, %v49
    %v1484 = vand.u32 2147483647, %v50
    %v1485 = vand.u32 2147483647, %v51
    %v1486 = vand.u32 2147483647, %v52
    %v1487 = vand.u32 2147483647, %v53
    %v1488 = vand.u32 2147483647, %v54
    %v1489 = vand.u32 2147483647, %v55
    %v1490 = vsub.f32 0.0, %v1474
    %v1491 = vsub.f32 0.0, %v1475
    %v1492 = vsub.f32 0.0, %v1476
    %v1493 = vsub.f32 0.0, %v1477
    %v1494 = vsub.f32 0.0, %v1478
    %v1495 = vsub.f32 0.0, %v1479
    %v1496 = vsub.f32 0.0, %v1480
    %v1497 = vsub.f32 0.0, %v1481
    %v1498 = vsub.f32 0.0, %v1482
    %v1499 = vsub.f32 0.0, %v1483
    %v1500 = vsub.f32 0.0, %v1484
    %v1501 = vsub.f32 0.0, %v1485
    %v1502 = vsub.f32 0.0, %v1486
    %v1503 = vsub.f32 0.0, %v1487
    %v1504 = vsub.f32 0.0, %v1488
    %v1505 = vsub.f32 0.0, %v1489
    %v1506 = vmul.f32 %v1490, 1.442695
    %v1507 = vpow.pop %v1506
    %v1508 = vmul.f32 %v1491, 1.442695
    %v1509 = vpow.pop %v1508
    %v1510 = vmul.f32 %v1492, 1.442695
    %v1511 = vpow.pop %v1510
    %v1512 = vmul.f32 %v1493, 1.442695
    %v1513 = vpow.pop %v1512
    %v1514 = vmul.f32 %v1494, 1.442695
    %v1515 = vpow.pop %v1514
    %v1516 = vmul.f32 %v1495, 1.442695
    %v1517 = vpow.pop %v1516
    %v1518 = vmul.f32 %v1496, 1.442695
    %v1519 = vpow.pop %v1518
    %v1520 = vmul.f32 %v1497, 1.442695
    %v1521 = vpow.pop %v1520
    %v1522 = vmul.f32 %v1498, 1.442695
    %v1523 = vpow.pop %v1522
    %v1524 = vmul.f32 %v1499, 1.442695
    %v1525 = vpow.pop %v1524
    %v1526 = vmul.f32 %v1500, 1.442695
    %v1527 = vpow.pop %v1526
    %v1528 = vmul.f32 %v1501, 1.442695
    %v1529 = vpow.pop %v1528
    %v1530 = vmul.f32 %v1502, 1.442695
    %v1531 = vpow.pop %v1530
    %v1532 = vmul.f32 %v1503, 1.442695
    %v1533 = vpow.pop %v1532
    %v1534 = vmul.f32 %v1504, 1.442695
    %v1535 = vpow.pop %v1534
    %v1536 = vmul.f32 %v1505, 1.442695
    %v1537 = vpow.pop %v1536
    %vm1538 = vcmp.gt.f32.partialorder %v1507, 0.0001
    %vm1539 = vcmp.gt.f32.partialorder %v1509, 0.0001
    %vm1540 = vcmp.gt.f32.partialorder %v1511, 0.0001
    %vm1541 = vcmp.gt.f32.partialorder %v1513, 0.0001
    %vm1542 = vcmp.gt.f32.partialorder %v1515, 0.0001
    %vm1543 = vcmp.gt.f32.partialorder %v1517, 0.0001
    %vm1544 = vcmp.gt.f32.partialorder %v1519, 0.0001
    %vm1545 = vcmp.gt.f32.partialorder %v1521, 0.0001
    %vm1546 = vcmp.gt.f32.partialorder %v1523, 0.0001
    %vm1547 = vcmp.gt.f32.partialorder %v1525, 0.0001
    %vm1548 = vcmp.gt.f32.partialorder %v1527, 0.0001
    %vm1549 = vcmp.gt.f32.partialorder %v1529, 0.0001
    %vm1550 = vcmp.gt.f32.partialorder %v1531, 0.0001
    %vm1551 = vcmp.gt.f32.partialorder %v1533, 0.0001
    %vm1552 = vcmp.gt.f32.partialorder %v1535, 0.0001
    %vm1553 = vcmp.gt.f32.partialorder %v1537, 0.0001
    %v1554 = vadd.f32 %v1507, 1.0
    %v1555 = vadd.f32 %v1509, 1.0
    %v1556 = vadd.f32 %v1511, 1.0
    %v1557 = vadd.f32 %v1513, 1.0
    %v1558 = vadd.f32 %v1515, 1.0
    %v1559 = vadd.f32 %v1517, 1.0
    %v1560 = vadd.f32 %v1519, 1.0
    %v1561 = vadd.f32 %v1521, 1.0
    %v1562 = vadd.f32 %v1523, 1.0
    %v1563 = vadd.f32 %v1525, 1.0
    %v1564 = vadd.f32 %v1527, 1.0
    %v1565 = vadd.f32 %v1529, 1.0
    %v1566 = vadd.f32 %v1531, 1.0
    %v1567 = vadd.f32 %v1533, 1.0
    %v1568 = vadd.f32 %v1535, 1.0
    %v1569 = vadd.f32 %v1537, 1.0
    %v1570 = vlog2.pop %v1554
    %v1571 = vmul.f32 %v1570, 0.6931472
    %v1572 = vlog2.pop %v1555
    %v1573 = vmul.f32 %v1572, 0.6931472
    %v1574 = vlog2.pop %v1556
    %v1575 = vmul.f32 %v1574, 0.6931472
    %v1576 = vlog2.pop %v1557
    %v1577 = vmul.f32 %v1576, 0.6931472
    %v1578 = vlog2.pop %v1558
    %v1579 = vmul.f32 %v1578, 0.6931472
    %v1580 = vlog2.pop %v1559
    %v1581 = vmul.f32 %v1580, 0.6931472
    %v1582 = vlog2.pop %v1560
    %v1583 = vmul.f32 %v1582, 0.6931472
    %v1584 = vlog2.pop %v1561
    %v1585 = vmul.f32 %v1584, 0.6931472
    %v1586 = vlog2.pop %v1562
    %v1587 = vmul.f32 %v1586, 0.6931472
    %v1588 = vlog2.pop %v1563
    %v1589 = vmul.f32 %v1588, 0.6931472
    %v1590 = vlog2.pop %v1564
    %v1591 = vmul.f32 %v1590, 0.6931472
    %v1592 = vlog2.pop %v1565
    %v1593 = vmul.f32 %v1592, 0.6931472
    %v1594 = vlog2.pop %v1566
    %v1595 = vmul.f32 %v1594, 0.6931472
    %v1596 = vlog2.pop %v1567
    %v1597 = vmul.f32 %v1596, 0.6931472
    %v1598 = vlog2.pop %v1568
    %v1599 = vmul.f32 %v1598, 0.6931472
    %v1600 = vlog2.pop %v1569
    %v1601 = vmul.f32 %v1600, 0.6931472
    %v1602 = vmul.f32 %v1507, 0.5
    %v1603 = vmul.f32 %v1509, 0.5
    %v1604 = vmul.f32 %v1511, 0.5
    %v1605 = vmul.f32 %v1513, 0.5
    %v1606 = vmul.f32 %v1515, 0.5
    %v1607 = vmul.f32 %v1517, 0.5
    %v1608 = vmul.f32 %v1519, 0.5
    %v1609 = vmul.f32 %v1521, 0.5
    %v1610 = vmul.f32 %v1523, 0.5
    %v1611 = vmul.f32 %v1525, 0.5
    %v1612 = vmul.f32 %v1527, 0.5
    %v1613 = vmul.f32 %v1529, 0.5
    %v1614 = vmul.f32 %v1531, 0.5
    %v1615 = vmul.f32 %v1533, 0.5
    %v1616 = vmul.f32 %v1535, 0.5
    %v1617 = vmul.f32 %v1537, 0.5
    %v1618 = vsub.f32 1.0, %v1602
    %v1619 = vsub.f32 1.0, %v1603
    %v1620 = vsub.f32 1.0, %v1604
    %v1621 = vsub.f32 1.0, %v1605
    %v1622 = vsub.f32 1.0, %v1606
    %v1623 = vsub.f32 1.0, %v1607
    %v1624 = vsub.f32 1.0, %v1608
    %v1625 = vsub.f32 1.0, %v1609
    %v1626 = vsub.f32 1.0, %v1610
    %v1627 = vsub.f32 1.0, %v1611
    %v1628 = vsub.f32 1.0, %v1612
    %v1629 = vsub.f32 1.0, %v1613
    %v1630 = vsub.f32 1.0, %v1614
    %v1631 = vsub.f32 1.0, %v1615
    %v1632 = vsub.f32 1.0, %v1616
    %v1633 = vsub.f32 1.0, %v1617
    %v1634 = vmul.f32 %v1507, %v1618
    %v1635 = vmul.f32 %v1509, %v1619
    %v1636 = vmul.f32 %v1511, %v1620
    %v1637 = vmul.f32 %v1513, %v1621
    %v1638 = vmul.f32 %v1515, %v1622
    %v1639 = vmul.f32 %v1517, %v1623
    %v1640 = vmul.f32 %v1519, %v1624
    %v1641 = vmul.f32 %v1521, %v1625
    %v1642 = vmul.f32 %v1523, %v1626
    %v1643 = vmul.f32 %v1525, %v1627
    %v1644 = vmul.f32 %v1527, %v1628
    %v1645 = vmul.f32 %v1529, %v1629
    %v1646 = vmul.f32 %v1531, %v1630
    %v1647 = vmul.f32 %v1533, %v1631
    %v1648 = vmul.f32 %v1535, %v1632
    %v1649 = vmul.f32 %v1537, %v1633
    %v1650 = vsel %vm1538, %v1571, %v1634
    %v1651 = vsel %vm1539, %v1573, %v1635
    %v1652 = vsel %vm1540, %v1575, %v1636
    %v1653 = vsel %vm1541, %v1577, %v1637
    %v1654 = vsel %vm1542, %v1579, %v1638
    %v1655 = vsel %vm1543, %v1581, %v1639
    %v1656 = vsel %vm1544, %v1583, %v1640
    %v1657 = vsel %vm1545, %v1585, %v1641
    %v1658 = vsel %vm1546, %v1587, %v1642
    %v1659 = vsel %vm1547, %v1589, %v1643
    %v1660 = vsel %vm1548, %v1591, %v1644
    %v1661 = vsel %vm1549, %v1593, %v1645
    %v1662 = vsel %vm1550, %v1595, %v1646
    %v1663 = vsel %vm1551, %v1597, %v1647
    %v1664 = vsel %vm1552, %v1599, %v1648
    %v1665 = vsel %vm1553, %v1601, %v1649
    %v1666 = vadd.f32 %v1458, %v1650
    %v1667 = vadd.f32 %v1459, %v1651
    %v1668 = vadd.f32 %v1460, %v1652
    %v1669 = vadd.f32 %v1461, %v1653
    %v1670 = vadd.f32 %v1462, %v1654
    %v1671 = vadd.f32 %v1463, %v1655
    %v1672 = vadd.f32 %v1464, %v1656
    %v1673 = vadd.f32 %v1465, %v1657
    %v1674 = vadd.f32 %v1466, %v1658
    %v1675 = vadd.f32 %v1467, %v1659
    %v1676 = vadd.f32 %v1468, %v1660
    %v1677 = vadd.f32 %v1469, %v1661
    %v1678 = vadd.f32 %v1470, %v1662
    %v1679 = vadd.f32 %v1471, %v1663
    %v1680 = vadd.f32 %v1472, %v1664
    %v1681 = vadd.f32 %v1473, %v1665
    %v1682 = vmul.f32 %v1410, %v1666
    %v1683 = vmul.f32 %v1411, %v1667
    %v1684 = vmul.f32 %v1412, %v1668
    %v1685 = vmul.f32 %v1413, %v1669
    %v1686 = vmul.f32 %v1414, %v1670
    %v1687 = vmul.f32 %v1415, %v1671
    %v1688 = vmul.f32 %v1416, %v1672
    %v1689 = vmul.f32 %v1417, %v1673
    %v1690 = vmul.f32 %v1418, %v1674
    %v1691 = vmul.f32 %v1419, %v1675
    %v1692 = vmul.f32 %v1420, %v1676
    %v1693 = vmul.f32 %v1421, %v1677
    %v1694 = vmul.f32 %v1422, %v1678
    %v1695 = vmul.f32 %v1423, %v1679
    %v1696 = vmul.f32 %v1424, %v1680
    %v1697 = vmul.f32 %v1425, %v1681
    %v1698 = vsel %vm91, %v1682, 0.0
    %v1699 = vsel %vm91, %v1683, 0.0
    %v1700 = vadd.f32 %v1698, %v1699
    %v1701 = vsel %vm91, %v1684, 0.0
    %v1702 = vadd.f32 %v1700, %v1701
    %v1703 = vsel %vm91, %v1685, 0.0
    %v1704 = vadd.f32 %v1702, %v1703
    %v1705 = vsel %vm91, %v1686, 0.0
    %v1706 = vadd.f32 %v1704, %v1705
    %v1707 = vsel %vm91, %v1687, 0.0
    %v1708 = vadd.f32 %v1706, %v1707
    %v1709 = vsel %vm91, %v1688, 0.0
    %v1710 = vadd.f32 %v1708, %v1709
    %v1711 = vsel %vm91, %v1689, 0.0
    %v1712 = vadd.f32 %v1710, %v1711
    %v1713 = vsel %vm91, %v1690, 0.0
    %v1714 = vadd.f32 %v1712, %v1713
    %v1715 = vsel %vm91, %v1691, 0.0
    %v1716 = vadd.f32 %v1714, %v1715
    %v1717 = vsel %vm91, %v1692, 0.0
    %v1718 = vadd.f32 %v1716, %v1717
    %v1719 = vsel %vm91, %v1693, 0.0
    %v1720 = vadd.f32 %v1718, %v1719
    %v1721 = vsel %vm91, %v1694, 0.0
    %v1722 = vadd.f32 %v1720, %v1721
    %v1723 = vsel %vm91, %v1695, 0.0
    %v1724 = vadd.f32 %v1722, %v1723
    %v1725 = vsel %vm91, %v1696, 0.0
    %v1726 = vadd.f32 %v1724, %v1725
    %v1727 = vsel %vm91, %v1697, 0.0
    %v1728 = vadd.f32 %v1726, %v1727
    %1729 = vadd.xlane.f32.xlu0 %v1728
    %v1730 = vpop.xlane.xlu0 %1729
    %v1731 = vrot.slane %v1730, 4
    %v1732 = vadd.f32 %v1730, %v1731
    %v1733 = vrot.slane %v1732, 2
    %v1734 = vadd.f32 %v1732, %v1733
    %v1735 = vrot.slane %v1734, 1
    %v1736 = vadd.f32 %v1734, %v1735
    %s1737 = vtos %v1736
    %v1738 = vstv %s1737
    %v1739 = vadd.f32 %v1738, 0.0
    %1740 = vst [vmem:[#allocation7] sm:$0xff] %v1739
    // Predicated region
    $region18: #{tpu_custom_call.1} parent=1 // pred_check
      _
    $region19: #{tpu_custom_call.1} parent=1 // pred_check_branch
      %1742 = sbr.rel (0) target = $region21
    $region20: #{tpu_custom_call.1} parent=1 // pred_region
      %s1744 = ssub.s32 128, 128
      %1745 = vsyncadd [#allocation4], %s1744
      %s1747 = sshll.u32 [#allocation7], 4
      %s1748 = int_to_ptr.vmem [resolvable:$true] %s1747
      %1750 = dma.vmem_to_hbm [thread:$0]  %s1748, 128, %s2, [#allocation4]
    $region21: #{tpu_custom_call.1} parent=1 // pred_fallthru
      _
    // Predicated region
    $region22: #{tpu_custom_call.1} parent=1 // pred_check
      _
    $region23: #{tpu_custom_call.1} parent=1 // pred_check_branch
      %1752 = sbr.rel (0) target = $region25
    $region24: #{tpu_custom_call.1} parent=1 // pred_region
      %1753 = dma.done [#allocation4], 128
    $region25: #{tpu_custom_call.1} parent=1 // pred_fallthru
      _
    %1754 = vsyncpa [#allocation3], 1
    %1755 = vsyncpa [#allocation6], 1
    %1756 = vsyncpa [#allocation4], 1

</llo_original>
